<compile_context>
chip_gen: v7x
topology: tpu7x:2x2x1
jax: 0.10.0
libtpu: 0.0.40
codegen_flags: <defaults>
</compile_context>

<pallas_src>
import functools

import jax
import jax.numpy as jnp
from jax.experimental import pallas as pl
from jax.experimental.pallas import tpu as pltpu


# ------------------------------ fused per-(b,head) kernel ---------------------------------
def _rel_pos_2d_kernel(q_ref, qt_ref, relw_ref, relh_ref, o_ref, *, S):
    """Fully fused RelPosEmb2D for one (batch*head) slice.

    q_ref  : (1, S*S, d)  tokens in natural (x, y) order
    qt_ref : (1, S*S, d)  tokens in spatially transposed (y, x) order
    relw_ref: (2S-1, d)   rel_pos table of emb_w
    relh_ref: (2S-1, d)   rel_pos table of emb_h
    o_ref  : (1, S*S, S*S)
    """
    SS = S * S
    qb = q_ref[0]                                                   # (SS, d)
    qt = qt_ref[0]                                                  # (SS, d)

    # MXU: relative scores against both tables (accumulate in f32).
    A = jax.lax.dot_general(qb, relw_ref[...],
                            dimension_numbers=(((1,), (1,)), ((), ())),
                            preferred_element_type=jnp.float32)     # (SS, 2S-1)
    Bp = jax.lax.dot_general(qt, relh_ref[...],
                             dimension_numbers=(((1,), (1,)), ((), ())),
                             preferred_element_type=jnp.float32)    # (SS, 2S-1)
    C = A + Bp                                                      # (SS, 2S-1)

    # Fused relative->absolute + expand_emb broadcast:
    #   out[row, c*S + k] = C[row, (S-1 - row % S) + k]   (broadcast over c = col // S)
    rmod = jax.lax.broadcasted_iota(jnp.int32, (SS, SS), 0) % S     # row % S
    acc = jnp.zeros((SS, SS), jnp.float32)
    for o in range(S):                                              # static, S iterations
        w = C[:, S - 1 - o: 2 * S - 1 - o]                          # (SS, S) static lane slice
        t = jnp.concatenate([w] * S, axis=-1)                       # tile across column groups
        acc = jnp.where(rmod == o, t, acc)
    o_ref[0] = acc.astype(o_ref.dtype)


# ------------------------------------- forward --------------------------------------------
def rel_pos_emb_2d(q, rel_emb_w, rel_emb_h, h, w):
    """Pallas implementation of RelPosEmb2D.forward (shared heads, heads=None)."""
    # TODO(synk): the reference relative_to_absolute only works for square maps;
    # non-square feature maps would fail in PyTorch too.
    assert h == w, "reference implementation only supports square feature maps"
    b, heads, tokens, d = q.shape
    S = h
    assert tokens == S * S
    R = 2 * S - 1
    assert rel_emb_w.shape == (R, d) and rel_emb_h.shape == (R, d)

    BH = b * heads
    q_flat = q.reshape(BH, S * S, d)
    # Spatially transposed token order (y, x) for the r_w path: a tiny one-off XLA transpose;
    # the S^4-sized output the kernel writes dominates HBM traffic.
    q_t = q.reshape(BH, S, S, d).swapaxes(1, 2).reshape(BH, S * S, d)

    # TODO(synk): for very large feature maps (S >= ~45) tile the output-row dimension and
    # set vmem_limit_bytes (the per-step output block grows as S^4; v7x VMEM is 64 MiB).
    # TODO(synk): optionally cast q / rel tables to bf16 here (HBM-bound win on v6e/v7x);
    # kept f32 to match the f32 PyTorch module numerics exactly.
    out = pl.pallas_call(
        functools.partial(_rel_pos_2d_kernel, S=S),
        out_shape=jax.ShapeDtypeStruct((BH, S * S, S * S), jnp.float32),
        grid=(BH,),
        in_specs=[
            pl.BlockSpec((1, S * S, d), lambda i: (i, 0, 0)),
            pl.BlockSpec((1, S * S, d), lambda i: (i, 0, 0)),
            pl.BlockSpec((R, d), lambda i: (0, 0)),
            pl.BlockSpec((R, d), lambda i: (0, 0)),
        ],
        out_specs=pl.BlockSpec((1, S * S, S * S), lambda i: (i, 0, 0)),
        compiler_params=pltpu.CompilerParams(dimension_semantics=("parallel",)),
    )(q_flat, q_t, rel_emb_w, rel_emb_h)
    return out.reshape(b, heads, S * S, S * S)


# ------------------------- pure-JAX reference (literal PyTorch port) -----------------------
def relative_to_absolute(x):
    """[b, H, l, 2l-1] -> [b, H, l, l]; pad/reshape/slice exactly as in the PyTorch code."""
    b, H, l, _ = x.shape
    x = jnp.concatenate([x, jnp.zeros((b, H, l, 1), x.dtype)], axis=3)
    flat = x.reshape(b, H, l * 2 * l)
    flat = jnp.concatenate([flat, jnp.zeros((b, H, l - 1), x.dtype)], axis=2)
    final = flat.reshape(b, H, l + 1, 2 * l - 1)
    return final[:, :, :l, l - 1:]


def _ref_forward(q, rel_emb_w, rel_emb_h, h, w):
    b, heads, tokens, d = q.shape
    hp = jax.lax.Precision.HIGHEST
    q5 = q.reshape(b, heads, h, w, d)
    q_x = q5.reshape(b, heads * h, w, d)                       # 'b h (x y) d -> b (h x) y d'
    q_y = jnp.swapaxes(q5, 2, 3).reshape(b, heads * w, h, d)   # 'b h (x y) d -> b (h y) x d'
    r_h = relative_to_absolute(jnp.einsum('bhtd,rd->bhtr', q_x, rel_emb_w, precision=hp))
    r_w = relative_to_absolute(jnp.einsum('bhtd,rd->bhtr', q_y, rel_emb_h, precision=hp))

    def expand_emb(r, dim_size):
        # 'b (h x) i j -> b h x () i j' ; expand ; 'b h x1 x2 y1 y2 -> b h (x1 y1) (x2 y2)'
        bb, HX, I, J = r.shape
        H = HX // dim_size
        r6 = r.reshape(bb, H, dim_size, 1, I, J)
        r6 = jnp.broadcast_to(r6, (bb, H, dim_size, dim_size, I, J))
        r6 = r6.transpose(0, 1, 2, 4, 3, 5)                    # (b, h, x1, y1, x2, y2)
        return r6.reshape(bb, H, dim_size * I, dim_size * J)

    return expand_emb(r_h, h) + expand_emb(r_w, h)


if __name__ == "__main__":
    b, heads, S, d = 2, 2, 8, 32          # feat_map_size = (8, 8), dim_head = 32
    tokens = S * S

    key = jax.random.PRNGKey(0)
    k1, k2, k3 = jax.random.split(key, 3)
    q = jax.random.normal(k1, (b, heads, tokens, d), jnp.float32)
    scale = d ** (-0.5)
    rel_emb_w = jax.random.normal(k2, (2 * S - 1, d), jnp.float32) * scale
    rel_emb_h = jax.random.normal(k3, (2 * S - 1, d), jnp.float32) * scale

    out = jax.block_until_ready(rel_pos_emb_2d(q, rel_emb_w, rel_emb_h, S, S))
    ref = _ref_forward(q, rel_emb_w, rel_emb_h, S, S)

    assert out.shape == (b, heads, tokens, tokens), out.shape
    assert out.dtype == jnp.float32
    max_err = float(jnp.max(jnp.abs(out - ref)))
    assert jnp.allclose(out, ref, atol=2e-2, rtol=2e-2), f"mismatch vs reference: {max_err}"

    print("KERNEL_OK")
</pallas_src>

<mosaic_0001>
module attributes {stable_mosaic.version = 11 : i64} {
  func.func @_rel_pos_2d_kernel(%arg0: i32, %arg1: memref<1x64x32xf32, #tpu.memory_space<vmem>>, %arg2: memref<1x64x32xf32, #tpu.memory_space<vmem>>, %arg3: memref<15x32xf32, #tpu.memory_space<vmem>>, %arg4: memref<15x32xf32, #tpu.memory_space<vmem>>, %arg5: memref<1x64x64xf32, #tpu.memory_space<vmem>>) attributes {dimension_semantics = [#tpu.dimension_semantics<parallel>], iteration_bounds = array<i64: 4>, scalar_prefetch = 0 : i64, scratch_operands = 0 : i64, tpu.core_type = #tpu.core_type<tc>, window_params = [{transform_indices = @transform_0, window_bounds = array<i64: 1, 64, 32>}, {transform_indices = @transform_1, window_bounds = array<i64: 1, 64, 32>}, {pipeline_mode = #tpu.pipeline_mode<synchronous>, transform_indices = @transform_2, window_bounds = array<i64: 15, 32>}, {pipeline_mode = #tpu.pipeline_mode<synchronous>, transform_indices = @transform_3, window_bounds = array<i64: 15, 32>}, {transform_indices = @transform_4, window_bounds = array<i64: 1, 64, 64>}]} {
    %c0 = arith.constant 0 : index
    %c0_0 = arith.constant 0 : index
    %c0_1 = arith.constant 0 : index
    %0 = vector.load %arg1[%c0, %c0_0, %c0_1] : memref<1x64x32xf32, #tpu.memory_space<vmem>>, vector<1x64x32xf32>
    %1 = vector.shape_cast %0 : vector<1x64x32xf32> to vector<64x32xf32>
    %c0_2 = arith.constant 0 : index
    %c0_3 = arith.constant 0 : index
    %c0_4 = arith.constant 0 : index
    %2 = vector.load %arg2[%c0_2, %c0_3, %c0_4] : memref<1x64x32xf32, #tpu.memory_space<vmem>>, vector<1x64x32xf32>
    %3 = vector.shape_cast %2 : vector<1x64x32xf32> to vector<64x32xf32>
    %c0_5 = arith.constant 0 : index
    %c0_6 = arith.constant 0 : index
    %4 = vector.load %arg3[%c0_5, %c0_6] : memref<15x32xf32, #tpu.memory_space<vmem>>, vector<15x32xf32>
    %cst = arith.constant dense<0.000000e+00> : vector<64x15xf32>
    %5 = tpu.matmul %1, %4, %cst {dimension_numbers = #tpu.dot_dimension_numbers<[1], [1], [0], [0], [0, 0, 1, 0], [], []>} : vector<64x32xf32>, vector<15x32xf32>, vector<64x15xf32> -> vector<64x15xf32>
    %c0_7 = arith.constant 0 : index
    %c0_8 = arith.constant 0 : index
    %6 = vector.load %arg4[%c0_7, %c0_8] : memref<15x32xf32, #tpu.memory_space<vmem>>, vector<15x32xf32>
    %cst_9 = arith.constant dense<0.000000e+00> : vector<64x15xf32>
    %7 = tpu.matmul %3, %6, %cst_9 {dimension_numbers = #tpu.dot_dimension_numbers<[1], [1], [0], [0], [0, 0, 1, 0], [], []>} : vector<64x32xf32>, vector<15x32xf32>, vector<64x15xf32> -> vector<64x15xf32>
    %8 = arith.addf %5, %7 : vector<64x15xf32>
    %9 = tpu.iota {dimensions = array<i32: 0>} : vector<64x64xi32>
    %c8_i32 = arith.constant 8 : i32
    %c0_i32 = arith.constant 0 : i32
    %10 = arith.cmpi eq, %c8_i32, %c0_i32 : i32
    %c1_i32 = arith.constant 1 : i32
    %11 = arith.select %10, %c1_i32, %c8_i32 : i32
    %12 = vector.broadcast %11 : i32 to vector<64x64xi32>
    %13 = arith.remsi %9, %12 : vector<64x64xi32>
    %c0_i32_10 = arith.constant 0 : i32
    %14 = vector.broadcast %c0_i32_10 : i32 to vector<64x64xi32>
    %15 = arith.cmpi ne, %13, %14 : vector<64x64xi32>
    %c0_i32_11 = arith.constant 0 : i32
    %16 = vector.broadcast %c0_i32_11 : i32 to vector<64x64xi32>
    %17 = arith.cmpi slt, %13, %16 : vector<64x64xi32>
    %c0_i32_12 = arith.constant 0 : i32
    %18 = arith.cmpi slt, %11, %c0_i32_12 : i32
    %19 = vector.broadcast %18 : i1 to vector<64x64xi1>
    %20 = vector.broadcast %19 : vector<64x64xi1> to vector<64x64xi1>
    %21 = arith.xori %17, %20 : vector<64x64xi1>
    %22 = arith.andi %21, %15 : vector<64x64xi1>
    %23 = vector.broadcast %11 : i32 to vector<64x64xi32>
    %24 = arith.addi %13, %23 : vector<64x64xi32>
    %25 = arith.select %22, %24, %13 : vector<64x64xi1>, vector<64x64xi32>
    %cst_13 = arith.constant 0.000000e+00 : f32
    %26 = vector.broadcast %cst_13 : f32 to vector<64x64xf32>
    %27 = vector.extract_strided_slice %8 {offsets = [0, 7], sizes = [64, 8], strides = [1, 1]} : vector<64x15xf32> to vector<64x8xf32>
    %28 = tpu.concatenate %27, %27, %27, %27, %27, %27, %27, %27 in 1 : vector<64x8xf32>, vector<64x8xf32>, vector<64x8xf32>, vector<64x8xf32>, vector<64x8xf32>, vector<64x8xf32>, vector<64x8xf32>, vector<64x8xf32> -> vector<64x64xf32>
    %c0_i32_14 = arith.constant 0 : i32
    %29 = vector.broadcast %c0_i32_14 : i32 to vector<64x64xi32>
    %30 = arith.cmpi eq, %25, %29 : vector<64x64xi32>
    %31 = arith.select %30, %28, %26 : vector<64x64xi1>, vector<64x64xf32>
    %32 = vector.extract_strided_slice %8 {offsets = [0, 6], sizes = [64, 8], strides = [1, 1]} : vector<64x15xf32> to vector<64x8xf32>
    %33 = tpu.concatenate %32, %32, %32, %32, %32, %32, %32, %32 in 1 : vector<64x8xf32>, vector<64x8xf32>, vector<64x8xf32>, vector<64x8xf32>, vector<64x8xf32>, vector<64x8xf32>, vector<64x8xf32>, vector<64x8xf32> -> vector<64x64xf32>
    %c1_i32_15 = arith.constant 1 : i32
    %34 = vector.broadcast %c1_i32_15 : i32 to vector<64x64xi32>
    %35 = arith.cmpi eq, %25, %34 : vector<64x64xi32>
    %36 = arith.select %35, %33, %31 : vector<64x64xi1>, vector<64x64xf32>
    %37 = vector.extract_strided_slice %8 {offsets = [0, 5], sizes = [64, 8], strides = [1, 1]} : vector<64x15xf32> to vector<64x8xf32>
    %38 = tpu.concatenate %37, %37, %37, %37, %37, %37, %37, %37 in 1 : vector<64x8xf32>, vector<64x8xf32>, vector<64x8xf32>, vector<64x8xf32>, vector<64x8xf32>, vector<64x8xf32>, vector<64x8xf32>, vector<64x8xf32> -> vector<64x64xf32>
    %c2_i32 = arith.constant 2 : i32
    %39 = vector.broadcast %c2_i32 : i32 to vector<64x64xi32>
    %40 = arith.cmpi eq, %25, %39 : vector<64x64xi32>
    %41 = arith.select %40, %38, %36 : vector<64x64xi1>, vector<64x64xf32>
    %42 = vector.extract_strided_slice %8 {offsets = [0, 4], sizes = [64, 8], strides = [1, 1]} : vector<64x15xf32> to vector<64x8xf32>
    %43 = tpu.concatenate %42, %42, %42, %42, %42, %42, %42, %42 in 1 : vector<64x8xf32>, vector<64x8xf32>, vector<64x8xf32>, vector<64x8xf32>, vector<64x8xf32>, vector<64x8xf32>, vector<64x8xf32>, vector<64x8xf32> -> vector<64x64xf32>
    %c3_i32 = arith.constant 3 : i32
    %44 = vector.broadcast %c3_i32 : i32 to vector<64x64xi32>
    %45 = arith.cmpi eq, %25, %44 : vector<64x64xi32>
    %46 = arith.select %45, %43, %41 : vector<64x64xi1>, vector<64x64xf32>
    %47 = vector.extract_strided_slice %8 {offsets = [0, 3], sizes = [64, 8], strides = [1, 1]} : vector<64x15xf32> to vector<64x8xf32>
    %48 = tpu.concatenate %47, %47, %47, %47, %47, %47, %47, %47 in 1 : vector<64x8xf32>, vector<64x8xf32>, vector<64x8xf32>, vector<64x8xf32>, vector<64x8xf32>, vector<64x8xf32>, vector<64x8xf32>, vector<64x8xf32> -> vector<64x64xf32>
    %c4_i32 = arith.constant 4 : i32
    %49 = vector.broadcast %c4_i32 : i32 to vector<64x64xi32>
    %50 = arith.cmpi eq, %25, %49 : vector<64x64xi32>
    %51 = arith.select %50, %48, %46 : vector<64x64xi1>, vector<64x64xf32>
    %52 = vector.extract_strided_slice %8 {offsets = [0, 2], sizes = [64, 8], strides = [1, 1]} : vector<64x15xf32> to vector<64x8xf32>
    %53 = tpu.concatenate %52, %52, %52, %52, %52, %52, %52, %52 in 1 : vector<64x8xf32>, vector<64x8xf32>, vector<64x8xf32>, vector<64x8xf32>, vector<64x8xf32>, vector<64x8xf32>, vector<64x8xf32>, vector<64x8xf32> -> vector<64x64xf32>
    %c5_i32 = arith.constant 5 : i32
    %54 = vector.broadcast %c5_i32 : i32 to vector<64x64xi32>
    %55 = arith.cmpi eq, %25, %54 : vector<64x64xi32>
    %56 = arith.select %55, %53, %51 : vector<64x64xi1>, vector<64x64xf32>
    %57 = vector.extract_strided_slice %8 {offsets = [0, 1], sizes = [64, 8], strides = [1, 1]} : vector<64x15xf32> to vector<64x8xf32>
    %58 = tpu.concatenate %57, %57, %57, %57, %57, %57, %57, %57 in 1 : vector<64x8xf32>, vector<64x8xf32>, vector<64x8xf32>, vector<64x8xf32>, vector<64x8xf32>, vector<64x8xf32>, vector<64x8xf32>, vector<64x8xf32> -> vector<64x64xf32>
    %c6_i32 = arith.constant 6 : i32
    %59 = vector.broadcast %c6_i32 : i32 to vector<64x64xi32>
    %60 = arith.cmpi eq, %25, %59 : vector<64x64xi32>
    %61 = arith.select %60, %58, %56 : vector<64x64xi1>, vector<64x64xf32>
    %62 = vector.extract_strided_slice %8 {offsets = [0, 0], sizes = [64, 8], strides = [1, 1]} : vector<64x15xf32> to vector<64x8xf32>
    %63 = tpu.concatenate %62, %62, %62, %62, %62, %62, %62, %62 in 1 : vector<64x8xf32>, vector<64x8xf32>, vector<64x8xf32>, vector<64x8xf32>, vector<64x8xf32>, vector<64x8xf32>, vector<64x8xf32>, vector<64x8xf32> -> vector<64x64xf32>
    %c7_i32 = arith.constant 7 : i32
    %64 = vector.broadcast %c7_i32 : i32 to vector<64x64xi32>
    %65 = arith.cmpi eq, %25, %64 : vector<64x64xi32>
    %66 = arith.select %65, %63, %61 : vector<64x64xi1>, vector<64x64xf32>
    %c0_16 = arith.constant 0 : index
    %c0_17 = arith.constant 0 : index
    %c0_18 = arith.constant 0 : index
    %67 = vector.load %arg5[%c0_16, %c0_17, %c0_18] : memref<1x64x64xf32, #tpu.memory_space<vmem>>, vector<1x64x64xf32>
    %68 = vector.shape_cast %67 : vector<1x64x64xf32> to vector<64x64xf32>
    %69 = vector.shape_cast %66 : vector<64x64xf32> to vector<1x64x64xf32>
    tpu.vector_store %arg5[%c0_16, %c0_17, %c0_18], %69 {strides = array<i32>} : memref<1x64x64xf32, #tpu.memory_space<vmem>>, vector<1x64x64xf32>,
    return
  }
  func.func @transform_0(%arg0: i32) -> (i32, i32, i32) {
    %c0_i32 = arith.constant 0 : i32
    %c0_i32_0 = arith.constant 0 : i32
    %c0_i32_1 = arith.constant 0 : i32
    return %arg0, %c0_i32, %c0_i32_0 : i32, i32, i32
  }
  func.func @transform_1(%arg0: i32) -> (i32, i32, i32) {
    %c0_i32 = arith.constant 0 : i32
    %c0_i32_0 = arith.constant 0 : i32
    %c0_i32_1 = arith.constant 0 : i32
    return %arg0, %c0_i32, %c0_i32_0 : i32, i32, i32
  }
  func.func @transform_2(%arg0: i32) -> (i32, i32) {
    %c0_i32 = arith.constant 0 : i32
    %c0_i32_0 = arith.constant 0 : i32
    %c0_i32_1 = arith.constant 0 : i32
    return %c0_i32, %c0_i32_0 : i32, i32
  }
  func.func @transform_3(%arg0: i32) -> (i32, i32) {
    %c0_i32 = arith.constant 0 : i32
    %c0_i32_0 = arith.constant 0 : i32
    %c0_i32_1 = arith.constant 0 : i32
    return %c0_i32, %c0_i32_0 : i32, i32
  }
  func.func @transform_4(%arg0: i32) -> (i32, i32, i32) {
    %c0_i32 = arith.constant 0 : i32
    %c0_i32_0 = arith.constant 0 : i32
    %c0_i32_1 = arith.constant 0 : i32
    return %arg0, %c0_i32, %c0_i32_0 : i32, i32, i32
  }
}

</mosaic_0001>

<llo_original>
// kernel: tpu_custom_call.1
$region0: #{tpu_custom_call.1}
  #allocation0 [shape = 'u32[]', space=smem, size = 0x4, offset = 0x4, fixed_abs, tag = 'smem constant byte address 0x4 - core index']
  #allocation1 [shape = 'u32[144,128]{1,0:T(1,128)}', space=vmem, size = 0x12000, scoped, tag = 'internal scratch']
  %s0 = inlined_call_operand.vmem [shape: f32[4,64,32], index: 0, kind: input, shape index: {}]
  %s1 = inlined_call_operand.vmem [shape: f32[4,64,32], index: 1, kind: input, shape index: {}]
  %s2 = inlined_call_operand.vmem [shape: f32[15,32], index: 2, kind: input, shape index: {}]
  %s3 = inlined_call_operand.vmem [shape: f32[15,32], index: 3, kind: input, shape index: {}]
  %s4 = inlined_call_operand.hbm [shape: f32[4,64,64], index: 4, kind: output, shape index: {}]
  %s5 = sld [smem:[#allocation0]]
  $region49: #{tpu_custom_call.1} parent=0
    _
  %s7 = ssub.s32 1, %s5
  %s8 = scalar_select 0, %s7, %s5
  $region1: #{tpu_custom_call.1} parent=0
    #allocation2 [shape = 'u8[65536]{0}', space=vmem, size = 0x10000, scoped, tag = 'output window, operand 0']
    #allocation3 [shape = 's32[2]{0}', space=sflag, size = 0x8, scoped, tag = 'scoped memory for tpu_custom_call.1']
    %9 = vsyncpa [#allocation3], 0
    %s10 = scalar_lea.sflag [#allocation3], 1
    %11 = vsyncpa %s10, 0
    loop: start=0, step=1, limit=6
    $region2: #{tpu_custom_call.1} parent=1 // loop_pre_header
      _
    $region3: #{tpu_custom_call.1} parent=1 // loop_header
      %s13 = sphi 0, %s17
      %p14 = scmp.ge.s32.totalorder %s13, 6
      %s23 = sphi 0, %s25
      %s26 = sphi 0, %s23
      %s27 = sphi 0, %s26
      %s43 = sphi 0, %s27
      %s49 = sphi 0, %s51
      %s52 = sphi 0, %s49
      %s53 = sphi 0, %s52
      %s69 = sphi 0, %s53
      %s73 = sphi 0, %s73
      %s75 = sphi 0, %s73
      %s76 = sphi 0, %s75
      %s90 = sphi 0, %s76
      %s94 = sphi 0, %s94
      %s96 = sphi 0, %s94
      %s97 = sphi 0, %s96
      %s111 = sphi 0, %s97
      %s117 = sphi 0, %s119
      %s120 = sphi 0, %s117
      %s121 = sphi 0, %s120
      %s137 = sphi 0, %s121
    $region4: #{tpu_custom_call.1} parent=1 // loop_header_branch
      %16 = sbr.rel (%p14) target = $region8
    $region5: #{tpu_custom_call.1} parent=1 // loop_body
      %s18 = ssub.s32 %s13, 1
      %s19 = ssub.s32 %s13, 2
      %s20 = sadd.s32 %s13, 1
      %s21 = ssub.s32 %s13, %s20
      %p22 = scmp.eq.s32.totalorder %s21, 0
      %s24 = sadd.s32 %s23, 1
      %s25 = scalar_select %p22, %s23, %s24
      %p28 = pneg %p22
      %p29 = scmp.eq.s32.totalorder %s13, 3
      %p30 = por %p28, %p29
      %p31 = scmp.ne.s32.totalorder %s23, %s26
      %p32 = scmp.eq.s32.totalorder %s13, 0
      %p33 = por %p31, %p32
      %p34 = scmp.ne.s32.totalorder %s23, %s26
      %p35 = scmp.eq.s32.totalorder %s18, 3
      %p36 = por %p34, %p35
      %p37 = scmp.ne.s32.totalorder %s26, %s27
      %p38 = scmp.eq.s32.totalorder %s18, 0
      %p39 = por %p37, %p38
      %p40 = scmp.ne.s32.totalorder %s26, %s27
      %p41 = scmp.eq.s32.totalorder %s19, 3
      %p42 = por %p40, %p41
      %p44 = scmp.ne.s32.totalorder %s27, %s43
      %p45 = scmp.eq.s32.totalorder %s19, 0
      %p46 = por %p44, %p45
      %s47 = ssub.s32 %s13, %s20
      %p48 = scmp.eq.s32.totalorder %s47, 0
      %s50 = sadd.s32 %s49, 1
      %s51 = scalar_select %p48, %s49, %s50
      %p54 = pneg %p48
      %p55 = scmp.eq.s32.totalorder %s13, 3
      %p56 = por %p54, %p55
      %p57 = scmp.ne.s32.totalorder %s49, %s52
      %p58 = scmp.eq.s32.totalorder %s13, 0
      %p59 = por %p57, %p58
      %p60 = scmp.ne.s32.totalorder %s49, %s52
      %p61 = scmp.eq.s32.totalorder %s18, 3
      %p62 = por %p60, %p61
      %p63 = scmp.ne.s32.totalorder %s52, %s53
      %p64 = scmp.eq.s32.totalorder %s18, 0
      %p65 = por %p63, %p64
      %p66 = scmp.ne.s32.totalorder %s52, %s53
      %p67 = scmp.eq.s32.totalorder %s19, 3
      %p68 = por %p66, %p67
      %p70 = scmp.ne.s32.totalorder %s53, %s69
      %p71 = scmp.eq.s32.totalorder %s19, 0
      %p72 = por %p70, %p71
      %s74 = sadd.s32 %s73, 1
      %p77 = scmp.eq.s32.totalorder %s13, 3
      %p78 = scmp.ne.s32.totalorder %s73, %s75
      %p79 = scmp.eq.s32.totalorder %s13, 0
      %p80 = por %p78, %p79
      %p81 = scmp.ne.s32.totalorder %s73, %s75
      %p82 = scmp.eq.s32.totalorder %s18, 3
      %p83 = por %p81, %p82
      %p84 = scmp.ne.s32.totalorder %s75, %s76
      %p85 = scmp.eq.s32.totalorder %s18, 0
      %p86 = por %p84, %p85
      %p87 = scmp.ne.s32.totalorder %s75, %s76
      %p88 = scmp.eq.s32.totalorder %s19, 3
      %p89 = por %p87, %p88
      %p91 = scmp.ne.s32.totalorder %s76, %s90
      %p92 = scmp.eq.s32.totalorder %s19, 0
      %p93 = por %p91, %p92
      %s95 = sadd.s32 %s94, 1
      %p98 = scmp.eq.s32.totalorder %s13, 3
      %p99 = scmp.ne.s32.totalorder %s94, %s96
      %p100 = scmp.eq.s32.totalorder %s13, 0
      %p101 = por %p99, %p100
      %p102 = scmp.ne.s32.totalorder %s94, %s96
      %p103 = scmp.eq.s32.totalorder %s18, 3
      %p104 = por %p102, %p103
      %p105 = scmp.ne.s32.totalorder %s96, %s97
      %p106 = scmp.eq.s32.totalorder %s18, 0
      %p107 = por %p105, %p106
      %p108 = scmp.ne.s32.totalorder %s96, %s97
      %p109 = scmp.eq.s32.totalorder %s19, 3
      %p110 = por %p108, %p109
      %p112 = scmp.ne.s32.totalorder %s97, %s111
      %p113 = scmp.eq.s32.totalorder %s19, 0
      %p114 = por %p112, %p113
      %s115 = ssub.s32 %s13, %s20
      %p116 = scmp.eq.s32.totalorder %s115, 0
      %s118 = sadd.s32 %s117, 1
      %s119 = scalar_select %p116, %s117, %s118
      %p122 = pneg %p116
      %p123 = scmp.eq.s32.totalorder %s13, 3
      %p124 = por %p122, %p123
      %p125 = scmp.ne.s32.totalorder %s117, %s120
      %p126 = scmp.eq.s32.totalorder %s13, 0
      %p127 = por %p125, %p126
      %p128 = scmp.ne.s32.totalorder %s117, %s120
      %p129 = scmp.eq.s32.totalorder %s18, 3
      %p130 = por %p128, %p129
      %p131 = scmp.ne.s32.totalorder %s120, %s121
      %p132 = scmp.eq.s32.totalorder %s18, 0
      %p133 = por %p131, %p132
      %p134 = scmp.ne.s32.totalorder %s120, %s121
      %p135 = scmp.eq.s32.totalorder %s19, 3
      %p136 = por %p134, %p135
      %p138 = scmp.ne.s32.totalorder %s121, %s137
      %p139 = scmp.eq.s32.totalorder %s19, 0
      %p140 = por %p138, %p139
      %p141 = scmp.le.s32.totalorder 1, %s13
      %p142 = scmp.lt.s32.totalorder %s13, 5
      %p143 = pnand %p141, %p142
      %p144 = pneg %p143
      // Predicated region
      $region9: #{tpu_custom_call.1} parent=5 // pred_check
        _
      $region10: #{tpu_custom_call.1} parent=5 // pred_check_branch
        %146 = sbr.rel (%p143) target = $region12
      $region11: #{tpu_custom_call.1} parent=5 // pred_region
        %s147 = ssub.s32 %s13, 1
        // Predicated region
        $region13: #{tpu_custom_call.1} parent=11 // pred_check
          %p148 = pneg %p86
        $region14: #{tpu_custom_call.1} parent=11 // pred_check_branch
          %150 = sbr.rel (%p148) target = $region16
        $region15: #{tpu_custom_call.1} parent=11 // pred_region
          _
        $region16: #{tpu_custom_call.1} parent=11 // pred_fallthru
          _
        // Predicated region
        $region17: #{tpu_custom_call.1} parent=11 // pred_check
          %p151 = pneg %p107
        $region18: #{tpu_custom_call.1} parent=11 // pred_check_branch
          %153 = sbr.rel (%p151) target = $region20
        $region19: #{tpu_custom_call.1} parent=11 // pred_region
          _
        $region20: #{tpu_custom_call.1} parent=11 // pred_fallthru
          _
      $region12: #{tpu_custom_call.1} parent=5 // pred_fallthru
        _
      %p154 = scmp.lt.s32.totalorder %s13, 4
      // Predicated region
      $region21: #{tpu_custom_call.1} parent=5 // pred_check
        %p155 = pneg %p154
      $region22: #{tpu_custom_call.1} parent=5 // pred_check_branch
        %157 = sbr.rel (%p155) target = $region24
      $region23: #{tpu_custom_call.1} parent=5 // pred_region
        // Predicated region
        $region25: #{tpu_custom_call.1} parent=23 // pred_check
          %p158 = pneg %p33
        $region26: #{tpu_custom_call.1} parent=23 // pred_check_branch
          %160 = sbr.rel (%p158) target = $region28
        $region27: #{tpu_custom_call.1} parent=23 // pred_region
          %p161 = scmp.lt.s32.totalorder %s13, 3
          %s162 = scalar_select %p161, %s13, 3
          %s163 = smul.addr %s162, 8
          %s164 = smul.addr %s163, 8
          %s165 = scalar_lea.vmem %s0, %s164
        $region28: #{tpu_custom_call.1} parent=23 // pred_fallthru
          _
        // Predicated region
        $region29: #{tpu_custom_call.1} parent=23 // pred_check
          %p166 = pneg %p59
        $region30: #{tpu_custom_call.1} parent=23 // pred_check_branch
          %168 = sbr.rel (%p166) target = $region32
        $region31: #{tpu_custom_call.1} parent=23 // pred_region
          %p169 = scmp.lt.s32.totalorder %s13, 3
          %s170 = scalar_select %p169, %s13, 3
          %s171 = smul.addr %s170, 8
          %s172 = smul.addr %s171, 8
          %s173 = scalar_lea.vmem %s1, %s172
        $region32: #{tpu_custom_call.1} parent=23 // pred_fallthru
          _
      $region24: #{tpu_custom_call.1} parent=5 // pred_fallthru
        _
      %p174 = scmp.le.s32.totalorder 1, %s13
      %p175 = scmp.lt.s32.totalorder %s13, 5
      %p176 = pnand %p174, %p175
      %p177 = pneg %p176
      // Predicated region
      $region33: #{tpu_custom_call.1} parent=5 // pred_check
        _
      $region34: #{tpu_custom_call.1} parent=5 // pred_check_branch
        %179 = sbr.rel (%p176) target = $region36
      $region35: #{tpu_custom_call.1} parent=5 // pred_region
        %s180 = ssub.s32 %s13, 1
        %p181 = scmp.lt.s32.totalorder %s18, 3
        %s182 = scalar_select %p181, %s18, 3
        %s183 = smul.addr %s182, 8
        %s184 = smul.addr %s183, 8
        %s185 = scalar_lea.vmem %s0, %s184
        %p186 = pneg %p39
        %p187 = pneg %p36
        %p188 = scmp.lt.s32.totalorder %s18, 3
        %s189 = scalar_select %p188, %s18, 3
        %s190 = smul.addr %s189, 8
        %s191 = smul.addr %s190, 8
        %s192 = scalar_lea.vmem %s1, %s191
        %p193 = pneg %p65
        %p194 = pneg %p62
        %p195 = pneg %p86
        %p196 = pneg %p83
        %p197 = pneg %p107
        %p198 = pneg %p104
        %p199 = pneg %p133
        %p200 = pneg %p130
        %s201 = sand.u32 %s120, 1
        %s202 = scalar_lea.sflag [#allocation3], %s201
        %s203 = sand.u32 %s120, 1
        %s204 = smul.addr %s203, 64
        %s205 = scalar_lea.vmem [#allocation2], %s204
        %p206 = scmp.lt.s32.totalorder %s18, 3
        %s207 = scalar_select %p206, %s18, 3
        %s208 = smul.addr %s207, 8
        %s209 = smul.addr %s208, 8
        %s210 = scalar_lea.vmem %s0, %s209
        %p211 = scmp.lt.s32.totalorder %s18, 3
        %s212 = scalar_select %p211, %s18, 3
        %s213 = smul.addr %s212, 8
        %s214 = smul.addr %s213, 8
        %s215 = scalar_lea.vmem %s1, %s214
        %v216 = vld [vmem:[%s210] sm:$0xff]
        %v217 = vld [vmem:[%s210 + $0x8] sm:$0xff]
        %v218 = vld [vmem:[%s210 + $0x10] sm:$0xff]
        %v219 = vld [vmem:[%s210 + $0x18] sm:$0xff]
        %v220 = vld [vmem:[%s210 + $0x20] sm:$0xff]
        %v221 = vld [vmem:[%s210 + $0x28] sm:$0xff]
        %v222 = vld [vmem:[%s210 + $0x30] sm:$0xff]
        %v223 = vld [vmem:[%s210 + $0x38] sm:$0xff]
        %v224 = vld [vmem:[%s215] sm:$0xff]
        %v225 = vld [vmem:[%s215 + $0x8] sm:$0xff]
        %v226 = vld [vmem:[%s215 + $0x10] sm:$0xff]
        %v227 = vld [vmem:[%s215 + $0x18] sm:$0xff]
        %v228 = vld [vmem:[%s215 + $0x20] sm:$0xff]
        %v229 = vld [vmem:[%s215 + $0x28] sm:$0xff]
        %v230 = vld [vmem:[%s215 + $0x30] sm:$0xff]
        %v231 = vld [vmem:[%s215 + $0x38] sm:$0xff]
        %v232 = vld [vmem:[%s2] sm:$0xff]
        %v233 = vld [vmem:[%s2 + $0x8] sm:$0x7f]
        %v234 = vld [vmem:[%s3] sm:$0xff]
        %v235 = vld [vmem:[%s3 + $0x8] sm:$0x7f]
        %vm236 = vcmask 261120
        %v238 = vsel %vm236, %v224, 0
        %v241 = vsel %vm236, %v225, 0
        %v244 = vsel %vm236, %v226, 0
        %v247 = vsel %vm236, %v227, 0
        %v250 = vsel %vm236, %v228, 0
        %v253 = vsel %vm236, %v229, 0
        %v256 = vsel %vm236, %v230, 0
        %v259 = vsel %vm236, %v231, 0
        %v262 = vsel %vm236, %v234, 0
        %v265 = vsel %vm236, %v235, 0
        %267 = vmatprep.subr.mxu0 0.0
        %268 = vmatpush1.xpose.msra.mxu0 %v262
        %269 = vmatprep.subr.mxu0 0.0
        %270 = vmatpush1.xpose.msra.mxu0 %v265
        %271 = vmatprep.subr.mxu0 0.0
        %272 = vmatpush1.xpose.msra.mxu0 0.0
        %273 = vmatprep.subr.mxu0 0.0
        %274 = vmatpush1.xpose.msra.mxu0 0.0
        %275 = vmatprep.subr.mxu0 0.0
        %276 = vmatpush1.xpose.msra.mxu0 0.0
        %277 = vmatprep.subr.mxu0 0.0
        %278 = vmatpush1.xpose.msra.mxu0 0.0
        %279 = vmatprep.subr.mxu0 0.0
        %280 = vmatpush1.xpose.msra.mxu0 0.0
        %281 = vmatprep.subr.mxu0 0.0
        %282 = vmatpush1.xpose.msra.mxu0 0.0
        %283 = vmatprep.subr.mxu0 0.0
        %284 = vmatpush1.xpose.msra.mxu0 0.0
        %285 = vmatprep.subr.mxu0 0.0
        %286 = vmatpush1.xpose.msra.mxu0 0.0
        %287 = vmatprep.subr.mxu0 0.0
        %288 = vmatpush1.xpose.msra.mxu0 0.0
        %289 = vmatprep.subr.mxu0 0.0
        %290 = vmatpush1.xpose.msra.mxu0 0.0
        %291 = vmatprep.subr.mxu0 0.0
        %292 = vmatpush1.xpose.msra.mxu0 0.0
        %293 = vmatprep.subr.mxu0 0.0
        %294 = vmatpush1.xpose.msra.mxu0 0.0
        %295 = vmatprep.subr.mxu0 0.0
        %296 = vmatpush1.xpose.msra.mxu0 0.0
        %297 = vmatprep.subr.mxu0 0.0
        %298 = vmatpush1.xpose.msra.mxu0 0.0
        %299 = vmatprep.subr.mxu0 0.0
        %300 = vmatpush1.xpose.msra.mxu0 0.0
        %301 = vmatprep.subr.mxu0 0.0
        %302 = vmatpush1.xpose.msra.mxu0 0.0
        %303 = vmatprep.subr.mxu0 0.0
        %304 = vmatpush1.xpose.msra.mxu0 0.0
        %305 = vmatprep.subr.mxu0 0.0
        %306 = vmatpush1.xpose.msra.mxu0 0.0
        %307 = vmatprep.subr.mxu0 0.0
        %308 = vmatpush1.xpose.msra.mxu0 0.0
        %309 = vmatprep.subr.mxu0 0.0
        %310 = vmatpush1.xpose.msra.mxu0 0.0
        %311 = vmatprep.subr.mxu0 0.0
        %312 = vmatpush1.xpose.msra.mxu0 0.0
        %313 = vmatprep.subr.mxu0 0.0
        %314 = vmatpush1.xpose.msra.mxu0 0.0
        %315 = vmatprep.subr.mxu0 0.0
        %316 = vmatpush1.xpose.msra.mxu0 0.0
        %317 = vmatprep.subr.mxu0 0.0
        %318 = vmatpush1.xpose.msra.mxu0 0.0
        %319 = vmatprep.subr.mxu0 0.0
        %320 = vmatpush1.xpose.msra.mxu0 0.0
        %321 = vmatprep.subr.mxu0 0.0
        %322 = vmatpush1.xpose.msra.mxu0 0.0
        %323 = vmatprep.subr.mxu0 0.0
        %324 = vmatpush1.xpose.msra.mxu0 0.0
        %325 = vmatprep.subr.mxu0 0.0
        %326 = vmatpush1.xpose.msra.mxu0 0.0
        %327 = vmatprep.subr.mxu0 0.0
        %328 = vmatpush1.xpose.msra.mxu0 0.0
        %329 = vmatprep.subr.mxu0 0.0
        %330 = vmatpush1.xpose.msra.mxu0 0.0
        %331 = vmatprep.mubr.f32.mxu0 0.0
        %332 = vmatmul.mubr.f32.gmra.mrb[0].mxu0 %v238
        %v333 = vpop.f32.mrb[0].mxu0
        %v334 = vadd.f32 0.0, %v333
        %v335 = vpop.f32.mrb[0].mxu0
        %336 = vmatprep.mubr.f32.mxu0 0.0
        %337 = vmatmul.mubr.f32.gmra.mrb[0].mxu0 %v241
        %v338 = vpop.f32.mrb[0].mxu0
        %v339 = vadd.f32 0.0, %v338
        %v340 = vpop.f32.mrb[0].mxu0
        %341 = vmatprep.mubr.f32.mxu0 0.0
        %342 = vmatmul.mubr.f32.gmra.mrb[0].mxu0 %v244
        %v343 = vpop.f32.mrb[0].mxu0
        %v344 = vadd.f32 0.0, %v343
        %v345 = vpop.f32.mrb[0].mxu0
        %346 = vmatprep.mubr.f32.mxu0 0.0
        %347 = vmatmul.mubr.f32.gmra.mrb[0].mxu0 %v247
        %v348 = vpop.f32.mrb[0].mxu0
        %v349 = vadd.f32 0.0, %v348
        %v350 = vpop.f32.mrb[0].mxu0
        %351 = vmatprep.mubr.f32.mxu0 0.0
        %352 = vmatmul.mubr.f32.gmra.mrb[0].mxu0 %v250
        %v353 = vpop.f32.mrb[0].mxu0
        %v354 = vadd.f32 0.0, %v353
        %v355 = vpop.f32.mrb[0].mxu0
        %356 = vmatprep.mubr.f32.mxu0 0.0
        %357 = vmatmul.mubr.f32.gmra.mrb[0].mxu0 %v253
        %v358 = vpop.f32.mrb[0].mxu0
        %v359 = vadd.f32 0.0, %v358
        %v360 = vpop.f32.mrb[0].mxu0
        %361 = vmatprep.mubr.f32.mxu0 0.0
        %362 = vmatmul.mubr.f32.gmra.mrb[0].mxu0 %v256
        %v363 = vpop.f32.mrb[0].mxu0
        %v364 = vadd.f32 0.0, %v363
        %v365 = vpop.f32.mrb[0].mxu0
        %366 = vmatprep.mubr.f32.mxu0 0.0
        %367 = vmatmul.mubr.f32.gmra.mrb[0].mxu0 %v259
        %v368 = vpop.f32.mrb[0].mxu0
        %v369 = vadd.f32 0.0, %v368
        %v370 = vpop.f32.mrb[0].mxu0
        %371 = vdwg.mxu0
        %v373 = vsel %vm236, %v216, 0
        %v376 = vsel %vm236, %v217, 0
        %v379 = vsel %vm236, %v218, 0
        %v382 = vsel %vm236, %v219, 0
        %v385 = vsel %vm236, %v220, 0
        %v388 = vsel %vm236, %v221, 0
        %v391 = vsel %vm236, %v222, 0
        %v394 = vsel %vm236, %v223, 0
        %v397 = vsel %vm236, %v232, 0
        %v400 = vsel %vm236, %v233, 0
        %402 = vmatprep.subr.mxu0 0.0
        %403 = vmatpush1.xpose.msra.mxu0 %v397
        %404 = vmatprep.subr.mxu0 0.0
        %405 = vmatpush1.xpose.msra.mxu0 %v400
        %406 = vmatprep.subr.mxu0 0.0
        %407 = vmatpush1.xpose.msra.mxu0 0.0
        %408 = vmatprep.subr.mxu0 0.0
        %409 = vmatpush1.xpose.msra.mxu0 0.0
        %410 = vmatprep.subr.mxu0 0.0
        %411 = vmatpush1.xpose.msra.mxu0 0.0
        %412 = vmatprep.subr.mxu0 0.0
        %413 = vmatpush1.xpose.msra.mxu0 0.0
        %414 = vmatprep.subr.mxu0 0.0
        %415 = vmatpush1.xpose.msra.mxu0 0.0
        %416 = vmatprep.subr.mxu0 0.0
        %417 = vmatpush1.xpose.msra.mxu0 0.0
        %418 = vmatprep.subr.mxu0 0.0
        %419 = vmatpush1.xpose.msra.mxu0 0.0
        %420 = vmatprep.subr.mxu0 0.0
        %421 = vmatpush1.xpose.msra.mxu0 0.0
        %422 = vmatprep.subr.mxu0 0.0
        %423 = vmatpush1.xpose.msra.mxu0 0.0
        %424 = vmatprep.subr.mxu0 0.0
        %425 = vmatpush1.xpose.msra.mxu0 0.0
        %426 = vmatprep.subr.mxu0 0.0
        %427 = vmatpush1.xpose.msra.mxu0 0.0
        %428 = vmatprep.subr.mxu0 0.0
        %429 = vmatpush1.xpose.msra.mxu0 0.0
        %430 = vmatprep.subr.mxu0 0.0
        %431 = vmatpush1.xpose.msra.mxu0 0.0
        %432 = vmatprep.subr.mxu0 0.0
        %433 = vmatpush1.xpose.msra.mxu0 0.0
        %434 = vmatprep.subr.mxu0 0.0
        %435 = vmatpush1.xpose.msra.mxu0 0.0
        %436 = vmatprep.subr.mxu0 0.0
        %437 = vmatpush1.xpose.msra.mxu0 0.0
        %438 = vmatprep.subr.mxu0 0.0
        %439 = vmatpush1.xpose.msra.mxu0 0.0
        %440 = vmatprep.subr.mxu0 0.0
        %441 = vmatpush1.xpose.msra.mxu0 0.0
        %442 = vmatprep.subr.mxu0 0.0
        %443 = vmatpush1.xpose.msra.mxu0 0.0
        %444 = vmatprep.subr.mxu0 0.0
        %445 = vmatpush1.xpose.msra.mxu0 0.0
        %446 = vmatprep.subr.mxu0 0.0
        %447 = vmatpush1.xpose.msra.mxu0 0.0
        %448 = vmatprep.subr.mxu0 0.0
        %449 = vmatpush1.xpose.msra.mxu0 0.0
        %450 = vmatprep.subr.mxu0 0.0
        %451 = vmatpush1.xpose.msra.mxu0 0.0
        %452 = vmatprep.subr.mxu0 0.0
        %453 = vmatpush1.xpose.msra.mxu0 0.0
        %454 = vmatprep.subr.mxu0 0.0
        %455 = vmatpush1.xpose.msra.mxu0 0.0
        %456 = vmatprep.subr.mxu0 0.0
        %457 = vmatpush1.xpose.msra.mxu0 0.0
        %458 = vmatprep.subr.mxu0 0.0
        %459 = vmatpush1.xpose.msra.mxu0 0.0
        %460 = vmatprep.subr.mxu0 0.0
        %461 = vmatpush1.xpose.msra.mxu0 0.0
        %462 = vmatprep.subr.mxu0 0.0
        %463 = vmatpush1.xpose.msra.mxu0 0.0
        %464 = vmatprep.subr.mxu0 0.0
        %465 = vmatpush1.xpose.msra.mxu0 0.0
        %466 = vmatprep.mubr.f32.mxu0 0.0
        %467 = vmatmul.mubr.f32.gmra.mrb[0].mxu0 %v373
        %v468 = vpop.f32.mrb[0].mxu0
        %v469 = vadd.f32 %v334, %v468
        %v470 = vpop.f32.mrb[0].mxu0
        %471 = vmatprep.mubr.f32.mxu0 0.0
        %472 = vmatmul.mubr.f32.gmra.mrb[0].mxu0 %v376
        %v473 = vpop.f32.mrb[0].mxu0
        %v474 = vadd.f32 %v339, %v473
        %v475 = vpop.f32.mrb[0].mxu0
        %476 = vmatprep.mubr.f32.mxu0 0.0
        %477 = vmatmul.mubr.f32.gmra.mrb[0].mxu0 %v379
        %v478 = vpop.f32.mrb[0].mxu0
        %v479 = vadd.f32 %v344, %v478
        %v480 = vpop.f32.mrb[0].mxu0
        %481 = vmatprep.mubr.f32.mxu0 0.0
        %482 = vmatmul.mubr.f32.gmra.mrb[0].mxu0 %v382
        %v483 = vpop.f32.mrb[0].mxu0
        %v484 = vadd.f32 %v349, %v483
        %v485 = vpop.f32.mrb[0].mxu0
        %486 = vmatprep.mubr.f32.mxu0 0.0
        %487 = vmatmul.mubr.f32.gmra.mrb[0].mxu0 %v385
        %v488 = vpop.f32.mrb[0].mxu0
        %v489 = vadd.f32 %v354, %v488
        %v490 = vpop.f32.mrb[0].mxu0
        %491 = vmatprep.mubr.f32.mxu0 0.0
        %492 = vmatmul.mubr.f32.gmra.mrb[0].mxu0 %v388
        %v493 = vpop.f32.mrb[0].mxu0
        %v494 = vadd.f32 %v359, %v493
        %v495 = vpop.f32.mrb[0].mxu0
        %496 = vmatprep.mubr.f32.mxu0 0.0
        %497 = vmatmul.mubr.f32.gmra.mrb[0].mxu0 %v391
        %v498 = vpop.f32.mrb[0].mxu0
        %v499 = vadd.f32 %v364, %v498
        %v500 = vpop.f32.mrb[0].mxu0
        %501 = vmatprep.mubr.f32.mxu0 0.0
        %502 = vmatmul.mubr.f32.gmra.mrb[0].mxu0 %v394
        %v503 = vpop.f32.mrb[0].mxu0
        %v504 = vadd.f32 %v369, %v503
        %v505 = vpop.f32.mrb[0].mxu0
        %506 = vdwg.mxu0
        %v507 = vlaneseq
        %v508 = vshrl.u32 %v507, 7
        %v509 = vadd.s32 %v508, 8
        %v510 = vadd.s32 %v508, 16
        %v511 = vadd.s32 %v508, 24
        %v512 = vadd.s32 %v508, 32
        %v513 = vadd.s32 %v508, 40
        %v514 = vadd.s32 %v508, 48
        %v515 = vadd.s32 %v508, 56
        %vm516 = vcmp.lt.s32.totalorder %v508, 0
        %v517 = vsub.s32 0, %v508
        %v518 = vsel %vm516, %v517, %v508
        %v519 = vshrl.u32 %v518, 3
        %v520 = vand.u32 %v518, 7
        %v521 = vsub.s32 0, %v520
        %v522 = vsel %vm516, %v521, %v520
        %vm523 = vcmp.lt.s32.totalorder %v509, 0
        %v524 = vsub.s32 0, %v509
        %v525 = vsel %vm523, %v524, %v509
        %v526 = vshrl.u32 %v525, 3
        %v527 = vand.u32 %v525, 7
        %v528 = vsub.s32 0, %v527
        %v529 = vsel %vm523, %v528, %v527
        %vm530 = vcmp.lt.s32.totalorder %v510, 0
        %v531 = vsub.s32 0, %v510
        %v532 = vsel %vm530, %v531, %v510
        %v533 = vshrl.u32 %v532, 3
        %v534 = vand.u32 %v532, 7
        %v535 = vsub.s32 0, %v534
        %v536 = vsel %vm530, %v535, %v534
        %vm537 = vcmp.lt.s32.totalorder %v511, 0
        %v538 = vsub.s32 0, %v511
        %v539 = vsel %vm537, %v538, %v511
        %v540 = vshrl.u32 %v539, 3
        %v541 = vand.u32 %v539, 7
        %v542 = vsub.s32 0, %v541
        %v543 = vsel %vm537, %v542, %v541
        %vm544 = vcmp.lt.s32.totalorder %v512, 0
        %v545 = vsub.s32 0, %v512
        %v546 = vsel %vm544, %v545, %v512
        %v547 = vshrl.u32 %v546, 3
        %v548 = vand.u32 %v546, 7
        %v549 = vsub.s32 0, %v548
        %v550 = vsel %vm544, %v549, %v548
        %vm551 = vcmp.lt.s32.totalorder %v513, 0
        %v552 = vsub.s32 0, %v513
        %v553 = vsel %vm551, %v552, %v513
        %v554 = vshrl.u32 %v553, 3
        %v555 = vand.u32 %v553, 7
        %v556 = vsub.s32 0, %v555
        %v557 = vsel %vm551, %v556, %v555
        %vm558 = vcmp.lt.s32.totalorder %v514, 0
        %v559 = vsub.s32 0, %v514
        %v560 = vsel %vm558, %v559, %v514
        %v561 = vshrl.u32 %v560, 3
        %v562 = vand.u32 %v560, 7
        %v563 = vsub.s32 0, %v562
        %v564 = vsel %vm558, %v563, %v562
        %vm565 = vcmp.lt.s32.totalorder %v515, 0
        %v566 = vsub.s32 0, %v515
        %v567 = vsel %vm565, %v566, %v515
        %v568 = vshrl.u32 %v567, 3
        %v569 = vand.u32 %v567, 7
        %v570 = vsub.s32 0, %v569
        %v571 = vsel %vm565, %v570, %v569
        %vm572 = vcmp.ne.s32.totalorder %v522, 0
        %vm573 = vcmp.ne.s32.totalorder %v529, 0
        %vm574 = vcmp.ne.s32.totalorder %v536, 0
        %vm575 = vcmp.ne.s32.totalorder %v543, 0
        %vm576 = vcmp.ne.s32.totalorder %v550, 0
        %vm577 = vcmp.ne.s32.totalorder %v557, 0
        %vm578 = vcmp.ne.s32.totalorder %v564, 0
        %vm579 = vcmp.ne.s32.totalorder %v571, 0
        %vm580 = vcmp.lt.s32.totalorder %v522, 0
        %vm581 = vcmp.lt.s32.totalorder %v529, 0
        %vm582 = vcmp.lt.s32.totalorder %v536, 0
        %vm583 = vcmp.lt.s32.totalorder %v543, 0
        %vm584 = vcmp.lt.s32.totalorder %v550, 0
        %vm585 = vcmp.lt.s32.totalorder %v557, 0
        %vm586 = vcmp.lt.s32.totalorder %v564, 0
        %vm587 = vcmp.lt.s32.totalorder %v571, 0
        %vm588 = vmand %vm580, %vm572
        %vm589 = vmand %vm581, %vm573
        %vm590 = vmand %vm582, %vm574
        %vm591 = vmand %vm583, %vm575
        %vm592 = vmand %vm584, %vm576
        %vm593 = vmand %vm585, %vm577
        %vm594 = vmand %vm586, %vm578
        %vm595 = vmand %vm587, %vm579
        %v596 = vadd.s32 %v522, 8
        %v597 = vadd.s32 %v529, 8
        %v598 = vadd.s32 %v536, 8
        %v599 = vadd.s32 %v543, 8
        %v600 = vadd.s32 %v550, 8
        %v601 = vadd.s32 %v557, 8
        %v602 = vadd.s32 %v564, 8
        %v603 = vadd.s32 %v571, 8
        %v604 = vsel %vm588, %v596, %v522
        %v605 = vsel %vm589, %v597, %v529
        %v606 = vsel %vm590, %v598, %v536
        %v607 = vsel %vm591, %v599, %v543
        %v608 = vsel %vm592, %v600, %v550
        %v609 = vsel %vm593, %v601, %v557
        %v610 = vsel %vm594, %v602, %v564
        %v611 = vsel %vm595, %v603, %v571
        %620 = vrot.lane.b32.xlu0 %v469, 121
        %v621 = vpop.permute.xlu0 %620
        %622 = vrot.lane.b32.xlu0 %v474, 121
        %v623 = vpop.permute.xlu0 %622
        %624 = vrot.lane.b32.xlu0 %v479, 121
        %v625 = vpop.permute.xlu0 %624
        %626 = vrot.lane.b32.xlu0 %v484, 121
        %v627 = vpop.permute.xlu0 %626
        %628 = vrot.lane.b32.xlu0 %v489, 121
        %v629 = vpop.permute.xlu0 %628
        %630 = vrot.lane.b32.xlu0 %v494, 121
        %v631 = vpop.permute.xlu0 %630
        %632 = vrot.lane.b32.xlu0 %v499, 121
        %v633 = vpop.permute.xlu0 %632
        %634 = vrot.lane.b32.xlu0 %v504, 121
        %v635 = vpop.permute.xlu0 %634
        %644 = vrot.lane.b32.xlu0 %v469, 1
        %v645 = vpop.permute.xlu0 %644
        %646 = vrot.lane.b32.xlu0 %v474, 1
        %v647 = vpop.permute.xlu0 %646
        %648 = vrot.lane.b32.xlu0 %v479, 1
        %v649 = vpop.permute.xlu0 %648
        %650 = vrot.lane.b32.xlu0 %v484, 1
        %v651 = vpop.permute.xlu0 %650
        %652 = vrot.lane.b32.xlu0 %v489, 1
        %v653 = vpop.permute.xlu0 %652
        %654 = vrot.lane.b32.xlu0 %v494, 1
        %v655 = vpop.permute.xlu0 %654
        %656 = vrot.lane.b32.xlu0 %v499, 1
        %v657 = vpop.permute.xlu0 %656
        %658 = vrot.lane.b32.xlu0 %v504, 1
        %v659 = vpop.permute.xlu0 %658
        %668 = vrot.lane.b32.xlu0 %v469, 9
        %v669 = vpop.permute.xlu0 %668
        %670 = vrot.lane.b32.xlu0 %v474, 9
        %v671 = vpop.permute.xlu0 %670
        %672 = vrot.lane.b32.xlu0 %v479, 9
        %v673 = vpop.permute.xlu0 %672
        %674 = vrot.lane.b32.xlu0 %v484, 9
        %v675 = vpop.permute.xlu0 %674
        %676 = vrot.lane.b32.xlu0 %v489, 9
        %v677 = vpop.permute.xlu0 %676
        %678 = vrot.lane.b32.xlu0 %v494, 9
        %v679 = vpop.permute.xlu0 %678
        %680 = vrot.lane.b32.xlu0 %v499, 9
        %v681 = vpop.permute.xlu0 %680
        %682 = vrot.lane.b32.xlu0 %v504, 9
        %v683 = vpop.permute.xlu0 %682
        %692 = vrot.lane.b32.xlu0 %v469, 17
        %v693 = vpop.permute.xlu0 %692
        %694 = vrot.lane.b32.xlu0 %v474, 17
        %v695 = vpop.permute.xlu0 %694
        %696 = vrot.lane.b32.xlu0 %v479, 17
        %v697 = vpop.permute.xlu0 %696
        %698 = vrot.lane.b32.xlu0 %v484, 17
        %v699 = vpop.permute.xlu0 %698
        %700 = vrot.lane.b32.xlu0 %v489, 17
        %v701 = vpop.permute.xlu0 %700
        %702 = vrot.lane.b32.xlu0 %v494, 17
        %v703 = vpop.permute.xlu0 %702
        %704 = vrot.lane.b32.xlu0 %v499, 17
        %v705 = vpop.permute.xlu0 %704
        %706 = vrot.lane.b32.xlu0 %v504, 17
        %v707 = vpop.permute.xlu0 %706
        %716 = vrot.lane.b32.xlu0 %v469, 25
        %v717 = vpop.permute.xlu0 %716
        %718 = vrot.lane.b32.xlu0 %v474, 25
        %v719 = vpop.permute.xlu0 %718
        %720 = vrot.lane.b32.xlu0 %v479, 25
        %v721 = vpop.permute.xlu0 %720
        %722 = vrot.lane.b32.xlu0 %v484, 25
        %v723 = vpop.permute.xlu0 %722
        %724 = vrot.lane.b32.xlu0 %v489, 25
        %v725 = vpop.permute.xlu0 %724
        %726 = vrot.lane.b32.xlu0 %v494, 25
        %v727 = vpop.permute.xlu0 %726
        %728 = vrot.lane.b32.xlu0 %v499, 25
        %v729 = vpop.permute.xlu0 %728
        %730 = vrot.lane.b32.xlu0 %v504, 25
        %v731 = vpop.permute.xlu0 %730
        %740 = vrot.lane.b32.xlu0 %v469, 33
        %v741 = vpop.permute.xlu0 %740
        %742 = vrot.lane.b32.xlu0 %v474, 33
        %v743 = vpop.permute.xlu0 %742
        %744 = vrot.lane.b32.xlu0 %v479, 33
        %v745 = vpop.permute.xlu0 %744
        %746 = vrot.lane.b32.xlu0 %v484, 33
        %v747 = vpop.permute.xlu0 %746
        %748 = vrot.lane.b32.xlu0 %v489, 33
        %v749 = vpop.permute.xlu0 %748
        %750 = vrot.lane.b32.xlu0 %v494, 33
        %v751 = vpop.permute.xlu0 %750
        %752 = vrot.lane.b32.xlu0 %v499, 33
        %v753 = vpop.permute.xlu0 %752
        %754 = vrot.lane.b32.xlu0 %v504, 33
        %v755 = vpop.permute.xlu0 %754
        %764 = vrot.lane.b32.xlu0 %v469, 41
        %v765 = vpop.permute.xlu0 %764
        %766 = vrot.lane.b32.xlu0 %v474, 41
        %v767 = vpop.permute.xlu0 %766
        %768 = vrot.lane.b32.xlu0 %v479, 41
        %v769 = vpop.permute.xlu0 %768
        %770 = vrot.lane.b32.xlu0 %v484, 41
        %v771 = vpop.permute.xlu0 %770
        %772 = vrot.lane.b32.xlu0 %v489, 41
        %v773 = vpop.permute.xlu0 %772
        %774 = vrot.lane.b32.xlu0 %v494, 41
        %v775 = vpop.permute.xlu0 %774
        %776 = vrot.lane.b32.xlu0 %v499, 41
        %v777 = vpop.permute.xlu0 %776
        %778 = vrot.lane.b32.xlu0 %v504, 41
        %v779 = vpop.permute.xlu0 %778
        %788 = vrot.lane.b32.xlu0 %v469, 49
        %v789 = vpop.permute.xlu0 %788
        %790 = vrot.lane.b32.xlu0 %v474, 49
        %v791 = vpop.permute.xlu0 %790
        %792 = vrot.lane.b32.xlu0 %v479, 49
        %v793 = vpop.permute.xlu0 %792
        %794 = vrot.lane.b32.xlu0 %v484, 49
        %v795 = vpop.permute.xlu0 %794
        %796 = vrot.lane.b32.xlu0 %v489, 49
        %v797 = vpop.permute.xlu0 %796
        %798 = vrot.lane.b32.xlu0 %v494, 49
        %v799 = vpop.permute.xlu0 %798
        %800 = vrot.lane.b32.xlu0 %v499, 49
        %v801 = vpop.permute.xlu0 %800
        %802 = vrot.lane.b32.xlu0 %v504, 49
        %v803 = vpop.permute.xlu0 %802
        %vm812 = vcmask 64512
        %v813 = vsel %vm812, %v621, %v645
        %v814 = vsel %vm812, %v623, %v647
        %v815 = vsel %vm812, %v625, %v649
        %v816 = vsel %vm812, %v627, %v651
        %v817 = vsel %vm812, %v629, %v653
        %v818 = vsel %vm812, %v631, %v655
        %v819 = vsel %vm812, %v633, %v657
        %v820 = vsel %vm812, %v635, %v659
        %vm821 = vcmask 130048
        %v822 = vsel %vm821, %v813, %v669
        %v823 = vsel %vm821, %v814, %v671
        %v824 = vsel %vm821, %v815, %v673
        %v825 = vsel %vm821, %v816, %v675
        %v826 = vsel %vm821, %v817, %v677
        %v827 = vsel %vm821, %v818, %v679
        %v828 = vsel %vm821, %v819, %v681
        %v829 = vsel %vm821, %v820, %v683
        %vm830 = vcmask 195584
        %v831 = vsel %vm830, %v822, %v693
        %v832 = vsel %vm830, %v823, %v695
        %v833 = vsel %vm830, %v824, %v697
        %v834 = vsel %vm830, %v825, %v699
        %v835 = vsel %vm830, %v826, %v701
        %v836 = vsel %vm830, %v827, %v703
        %v837 = vsel %vm830, %v828, %v705
        %v838 = vsel %vm830, %v829, %v707
        %v839 = vsel %vm236, %v831, %v717
        %v840 = vsel %vm236, %v832, %v719
        %v841 = vsel %vm236, %v833, %v721
        %v842 = vsel %vm236, %v834, %v723
        %v843 = vsel %vm236, %v835, %v725
        %v844 = vsel %vm236, %v836, %v727
        %v845 = vsel %vm236, %v837, %v729
        %v846 = vsel %vm236, %v838, %v731
        %vm847 = vcmask 326656
        %v848 = vsel %vm847, %v839, %v741
        %v849 = vsel %vm847, %v840, %v743
        %v850 = vsel %vm847, %v841, %v745
        %v851 = vsel %vm847, %v842, %v747
        %v852 = vsel %vm847, %v843, %v749
        %v853 = vsel %vm847, %v844, %v751
        %v854 = vsel %vm847, %v845, %v753
        %v855 = vsel %vm847, %v846, %v755
        %vm856 = vcmask 392192
        %v857 = vsel %vm856, %v848, %v765
        %v858 = vsel %vm856, %v849, %v767
        %v859 = vsel %vm856, %v850, %v769
        %v860 = vsel %vm856, %v851, %v771
        %v861 = vsel %vm856, %v852, %v773
        %v862 = vsel %vm856, %v853, %v775
        %v863 = vsel %vm856, %v854, %v777
        %v864 = vsel %vm856, %v855, %v779
        %vm865 = vcmask 457728
        %v866 = vsel %vm865, %v857, %v789
        %v867 = vsel %vm865, %v858, %v791
        %v868 = vsel %vm865, %v859, %v793
        %v869 = vsel %vm865, %v860, %v795
        %v870 = vsel %vm865, %v861, %v797
        %v871 = vsel %vm865, %v862, %v799
        %v872 = vsel %vm865, %v863, %v801
        %v873 = vsel %vm865, %v864, %v803
        %vm874 = vcmp.eq.s32.totalorder %v604, 0
        %vm875 = vcmp.eq.s32.totalorder %v605, 0
        %vm876 = vcmp.eq.s32.totalorder %v606, 0
        %vm877 = vcmp.eq.s32.totalorder %v607, 0
        %vm878 = vcmp.eq.s32.totalorder %v608, 0
        %vm879 = vcmp.eq.s32.totalorder %v609, 0
        %vm880 = vcmp.eq.s32.totalorder %v610, 0
        %vm881 = vcmp.eq.s32.totalorder %v611, 0
        %v882 = vsel %vm874, %v866, 0.0
        %v883 = vsel %vm875, %v867, 0.0
        %v884 = vsel %vm876, %v868, 0.0
        %v885 = vsel %vm877, %v869, 0.0
        %v886 = vsel %vm878, %v870, 0.0
        %v887 = vsel %vm879, %v871, 0.0
        %v888 = vsel %vm880, %v872, 0.0
        %v889 = vsel %vm881, %v873, 0.0
        %890 = vrot.lane.b32.xlu0 %v469, 122
        %v891 = vpop.permute.xlu0 %890
        %892 = vrot.lane.b32.xlu0 %v474, 122
        %v893 = vpop.permute.xlu0 %892
        %894 = vrot.lane.b32.xlu0 %v479, 122
        %v895 = vpop.permute.xlu0 %894
        %896 = vrot.lane.b32.xlu0 %v484, 122
        %v897 = vpop.permute.xlu0 %896
        %898 = vrot.lane.b32.xlu0 %v489, 122
        %v899 = vpop.permute.xlu0 %898
        %900 = vrot.lane.b32.xlu0 %v494, 122
        %v901 = vpop.permute.xlu0 %900
        %902 = vrot.lane.b32.xlu0 %v499, 122
        %v903 = vpop.permute.xlu0 %902
        %904 = vrot.lane.b32.xlu0 %v504, 122
        %v905 = vpop.permute.xlu0 %904
        %914 = vrot.lane.b32.xlu0 %v469, 2
        %v915 = vpop.permute.xlu0 %914
        %916 = vrot.lane.b32.xlu0 %v474, 2
        %v917 = vpop.permute.xlu0 %916
        %918 = vrot.lane.b32.xlu0 %v479, 2
        %v919 = vpop.permute.xlu0 %918
        %920 = vrot.lane.b32.xlu0 %v484, 2
        %v921 = vpop.permute.xlu0 %920
        %922 = vrot.lane.b32.xlu0 %v489, 2
        %v923 = vpop.permute.xlu0 %922
        %924 = vrot.lane.b32.xlu0 %v494, 2
        %v925 = vpop.permute.xlu0 %924
        %926 = vrot.lane.b32.xlu0 %v499, 2
        %v927 = vpop.permute.xlu0 %926
        %928 = vrot.lane.b32.xlu0 %v504, 2
        %v929 = vpop.permute.xlu0 %928
        %938 = vrot.lane.b32.xlu0 %v469, 10
        %v939 = vpop.permute.xlu0 %938
        %940 = vrot.lane.b32.xlu0 %v474, 10
        %v941 = vpop.permute.xlu0 %940
        %942 = vrot.lane.b32.xlu0 %v479, 10
        %v943 = vpop.permute.xlu0 %942
        %944 = vrot.lane.b32.xlu0 %v484, 10
        %v945 = vpop.permute.xlu0 %944
        %946 = vrot.lane.b32.xlu0 %v489, 10
        %v947 = vpop.permute.xlu0 %946
        %948 = vrot.lane.b32.xlu0 %v494, 10
        %v949 = vpop.permute.xlu0 %948
        %950 = vrot.lane.b32.xlu0 %v499, 10
        %v951 = vpop.permute.xlu0 %950
        %952 = vrot.lane.b32.xlu0 %v504, 10
        %v953 = vpop.permute.xlu0 %952
        %962 = vrot.lane.b32.xlu0 %v469, 18
        %v963 = vpop.permute.xlu0 %962
        %964 = vrot.lane.b32.xlu0 %v474, 18
        %v965 = vpop.permute.xlu0 %964
        %966 = vrot.lane.b32.xlu0 %v479, 18
        %v967 = vpop.permute.xlu0 %966
        %968 = vrot.lane.b32.xlu0 %v484, 18
        %v969 = vpop.permute.xlu0 %968
        %970 = vrot.lane.b32.xlu0 %v489, 18
        %v971 = vpop.permute.xlu0 %970
        %972 = vrot.lane.b32.xlu0 %v494, 18
        %v973 = vpop.permute.xlu0 %972
        %974 = vrot.lane.b32.xlu0 %v499, 18
        %v975 = vpop.permute.xlu0 %974
        %976 = vrot.lane.b32.xlu0 %v504, 18
        %v977 = vpop.permute.xlu0 %976
        %986 = vrot.lane.b32.xlu0 %v469, 26
        %v987 = vpop.permute.xlu0 %986
        %988 = vrot.lane.b32.xlu0 %v474, 26
        %v989 = vpop.permute.xlu0 %988
        %990 = vrot.lane.b32.xlu0 %v479, 26
        %v991 = vpop.permute.xlu0 %990
        %992 = vrot.lane.b32.xlu0 %v484, 26
        %v993 = vpop.permute.xlu0 %992
        %994 = vrot.lane.b32.xlu0 %v489, 26
        %v995 = vpop.permute.xlu0 %994
        %996 = vrot.lane.b32.xlu0 %v494, 26
        %v997 = vpop.permute.xlu0 %996
        %998 = vrot.lane.b32.xlu0 %v499, 26
        %v999 = vpop.permute.xlu0 %998
        %1000 = vrot.lane.b32.xlu0 %v504, 26
        %v1001 = vpop.permute.xlu0 %1000
        %1010 = vrot.lane.b32.xlu0 %v469, 34
        %v1011 = vpop.permute.xlu0 %1010
        %1012 = vrot.lane.b32.xlu0 %v474, 34
        %v1013 = vpop.permute.xlu0 %1012
        %1014 = vrot.lane.b32.xlu0 %v479, 34
        %v1015 = vpop.permute.xlu0 %1014
        %1016 = vrot.lane.b32.xlu0 %v484, 34
        %v1017 = vpop.permute.xlu0 %1016
        %1018 = vrot.lane.b32.xlu0 %v489, 34
        %v1019 = vpop.permute.xlu0 %1018
        %1020 = vrot.lane.b32.xlu0 %v494, 34
        %v1021 = vpop.permute.xlu0 %1020
        %1022 = vrot.lane.b32.xlu0 %v499, 34
        %v1023 = vpop.permute.xlu0 %1022
        %1024 = vrot.lane.b32.xlu0 %v504, 34
        %v1025 = vpop.permute.xlu0 %1024
        %1034 = vrot.lane.b32.xlu0 %v469, 42
        %v1035 = vpop.permute.xlu0 %1034
        %1036 = vrot.lane.b32.xlu0 %v474, 42
        %v1037 = vpop.permute.xlu0 %1036
        %1038 = vrot.lane.b32.xlu0 %v479, 42
        %v1039 = vpop.permute.xlu0 %1038
        %1040 = vrot.lane.b32.xlu0 %v484, 42
        %v1041 = vpop.permute.xlu0 %1040
        %1042 = vrot.lane.b32.xlu0 %v489, 42
        %v1043 = vpop.permute.xlu0 %1042
        %1044 = vrot.lane.b32.xlu0 %v494, 42
        %v1045 = vpop.permute.xlu0 %1044
        %1046 = vrot.lane.b32.xlu0 %v499, 42
        %v1047 = vpop.permute.xlu0 %1046
        %1048 = vrot.lane.b32.xlu0 %v504, 42
        %v1049 = vpop.permute.xlu0 %1048
        %1058 = vrot.lane.b32.xlu0 %v469, 50
        %v1059 = vpop.permute.xlu0 %1058
        %1060 = vrot.lane.b32.xlu0 %v474, 50
        %v1061 = vpop.permute.xlu0 %1060
        %1062 = vrot.lane.b32.xlu0 %v479, 50
        %v1063 = vpop.permute.xlu0 %1062
        %1064 = vrot.lane.b32.xlu0 %v484, 50
        %v1065 = vpop.permute.xlu0 %1064
        %1066 = vrot.lane.b32.xlu0 %v489, 50
        %v1067 = vpop.permute.xlu0 %1066
        %1068 = vrot.lane.b32.xlu0 %v494, 50
        %v1069 = vpop.permute.xlu0 %1068
        %1070 = vrot.lane.b32.xlu0 %v499, 50
        %v1071 = vpop.permute.xlu0 %1070
        %1072 = vrot.lane.b32.xlu0 %v504, 50
        %v1073 = vpop.permute.xlu0 %1072
        %v1082 = vsel %vm812, %v891, %v915
        %v1083 = vsel %vm812, %v893, %v917
        %v1084 = vsel %vm812, %v895, %v919
        %v1085 = vsel %vm812, %v897, %v921
        %v1086 = vsel %vm812, %v899, %v923
        %v1087 = vsel %vm812, %v901, %v925
        %v1088 = vsel %vm812, %v903, %v927
        %v1089 = vsel %vm812, %v905, %v929
        %v1090 = vsel %vm821, %v1082, %v939
        %v1091 = vsel %vm821, %v1083, %v941
        %v1092 = vsel %vm821, %v1084, %v943
        %v1093 = vsel %vm821, %v1085, %v945
        %v1094 = vsel %vm821, %v1086, %v947
        %v1095 = vsel %vm821, %v1087, %v949
        %v1096 = vsel %vm821, %v1088, %v951
        %v1097 = vsel %vm821, %v1089, %v953
        %v1098 = vsel %vm830, %v1090, %v963
        %v1099 = vsel %vm830, %v1091, %v965
        %v1100 = vsel %vm830, %v1092, %v967
        %v1101 = vsel %vm830, %v1093, %v969
        %v1102 = vsel %vm830, %v1094, %v971
        %v1103 = vsel %vm830, %v1095, %v973
        %v1104 = vsel %vm830, %v1096, %v975
        %v1105 = vsel %vm830, %v1097, %v977
        %v1106 = vsel %vm236, %v1098, %v987
        %v1107 = vsel %vm236, %v1099, %v989
        %v1108 = vsel %vm236, %v1100, %v991
        %v1109 = vsel %vm236, %v1101, %v993
        %v1110 = vsel %vm236, %v1102, %v995
        %v1111 = vsel %vm236, %v1103, %v997
        %v1112 = vsel %vm236, %v1104, %v999
        %v1113 = vsel %vm236, %v1105, %v1001
        %v1114 = vsel %vm847, %v1106, %v1011
        %v1115 = vsel %vm847, %v1107, %v1013
        %v1116 = vsel %vm847, %v1108, %v1015
        %v1117 = vsel %vm847, %v1109, %v1017
        %v1118 = vsel %vm847, %v1110, %v1019
        %v1119 = vsel %vm847, %v1111, %v1021
        %v1120 = vsel %vm847, %v1112, %v1023
        %v1121 = vsel %vm847, %v1113, %v1025
        %v1122 = vsel %vm856, %v1114, %v1035
        %v1123 = vsel %vm856, %v1115, %v1037
        %v1124 = vsel %vm856, %v1116, %v1039
        %v1125 = vsel %vm856, %v1117, %v1041
        %v1126 = vsel %vm856, %v1118, %v1043
        %v1127 = vsel %vm856, %v1119, %v1045
        %v1128 = vsel %vm856, %v1120, %v1047
        %v1129 = vsel %vm856, %v1121, %v1049
        %v1130 = vsel %vm865, %v1122, %v1059
        %v1131 = vsel %vm865, %v1123, %v1061
        %v1132 = vsel %vm865, %v1124, %v1063
        %v1133 = vsel %vm865, %v1125, %v1065
        %v1134 = vsel %vm865, %v1126, %v1067
        %v1135 = vsel %vm865, %v1127, %v1069
        %v1136 = vsel %vm865, %v1128, %v1071
        %v1137 = vsel %vm865, %v1129, %v1073
        %vm1138 = vcmp.eq.s32.totalorder %v604, 1
        %vm1139 = vcmp.eq.s32.totalorder %v605, 1
        %vm1140 = vcmp.eq.s32.totalorder %v606, 1
        %vm1141 = vcmp.eq.s32.totalorder %v607, 1
        %vm1142 = vcmp.eq.s32.totalorder %v608, 1
        %vm1143 = vcmp.eq.s32.totalorder %v609, 1
        %vm1144 = vcmp.eq.s32.totalorder %v610, 1
        %vm1145 = vcmp.eq.s32.totalorder %v611, 1
        %v1146 = vsel %vm1138, %v1130, %v882
        %v1147 = vsel %vm1139, %v1131, %v883
        %v1148 = vsel %vm1140, %v1132, %v884
        %v1149 = vsel %vm1141, %v1133, %v885
        %v1150 = vsel %vm1142, %v1134, %v886
        %v1151 = vsel %vm1143, %v1135, %v887
        %v1152 = vsel %vm1144, %v1136, %v888
        %v1153 = vsel %vm1145, %v1137, %v889
        %1154 = vrot.lane.b32.xlu0 %v469, 123
        %v1155 = vpop.permute.xlu0 %1154
        %1156 = vrot.lane.b32.xlu0 %v474, 123
        %v1157 = vpop.permute.xlu0 %1156
        %1158 = vrot.lane.b32.xlu0 %v479, 123
        %v1159 = vpop.permute.xlu0 %1158
        %1160 = vrot.lane.b32.xlu0 %v484, 123
        %v1161 = vpop.permute.xlu0 %1160
        %1162 = vrot.lane.b32.xlu0 %v489, 123
        %v1163 = vpop.permute.xlu0 %1162
        %1164 = vrot.lane.b32.xlu0 %v494, 123
        %v1165 = vpop.permute.xlu0 %1164
        %1166 = vrot.lane.b32.xlu0 %v499, 123
        %v1167 = vpop.permute.xlu0 %1166
        %1168 = vrot.lane.b32.xlu0 %v504, 123
        %v1169 = vpop.permute.xlu0 %1168
        %1178 = vrot.lane.b32.xlu0 %v469, 3
        %v1179 = vpop.permute.xlu0 %1178
        %1180 = vrot.lane.b32.xlu0 %v474, 3
        %v1181 = vpop.permute.xlu0 %1180
        %1182 = vrot.lane.b32.xlu0 %v479, 3
        %v1183 = vpop.permute.xlu0 %1182
        %1184 = vrot.lane.b32.xlu0 %v484, 3
        %v1185 = vpop.permute.xlu0 %1184
        %1186 = vrot.lane.b32.xlu0 %v489, 3
        %v1187 = vpop.permute.xlu0 %1186
        %1188 = vrot.lane.b32.xlu0 %v494, 3
        %v1189 = vpop.permute.xlu0 %1188
        %1190 = vrot.lane.b32.xlu0 %v499, 3
        %v1191 = vpop.permute.xlu0 %1190
        %1192 = vrot.lane.b32.xlu0 %v504, 3
        %v1193 = vpop.permute.xlu0 %1192
        %1202 = vrot.lane.b32.xlu0 %v469, 11
        %v1203 = vpop.permute.xlu0 %1202
        %1204 = vrot.lane.b32.xlu0 %v474, 11
        %v1205 = vpop.permute.xlu0 %1204
        %1206 = vrot.lane.b32.xlu0 %v479, 11
        %v1207 = vpop.permute.xlu0 %1206
        %1208 = vrot.lane.b32.xlu0 %v484, 11
        %v1209 = vpop.permute.xlu0 %1208
        %1210 = vrot.lane.b32.xlu0 %v489, 11
        %v1211 = vpop.permute.xlu0 %1210
        %1212 = vrot.lane.b32.xlu0 %v494, 11
        %v1213 = vpop.permute.xlu0 %1212
        %1214 = vrot.lane.b32.xlu0 %v499, 11
        %v1215 = vpop.permute.xlu0 %1214
        %1216 = vrot.lane.b32.xlu0 %v504, 11
        %v1217 = vpop.permute.xlu0 %1216
        %1226 = vrot.lane.b32.xlu0 %v469, 19
        %v1227 = vpop.permute.xlu0 %1226
        %1228 = vrot.lane.b32.xlu0 %v474, 19
        %v1229 = vpop.permute.xlu0 %1228
        %1230 = vrot.lane.b32.xlu0 %v479, 19
        %v1231 = vpop.permute.xlu0 %1230
        %1232 = vrot.lane.b32.xlu0 %v484, 19
        %v1233 = vpop.permute.xlu0 %1232
        %1234 = vrot.lane.b32.xlu0 %v489, 19
        %v1235 = vpop.permute.xlu0 %1234
        %1236 = vrot.lane.b32.xlu0 %v494, 19
        %v1237 = vpop.permute.xlu0 %1236
        %1238 = vrot.lane.b32.xlu0 %v499, 19
        %v1239 = vpop.permute.xlu0 %1238
        %1240 = vrot.lane.b32.xlu0 %v504, 19
        %v1241 = vpop.permute.xlu0 %1240
        %1250 = vrot.lane.b32.xlu0 %v469, 27
        %v1251 = vpop.permute.xlu0 %1250
        %1252 = vrot.lane.b32.xlu0 %v474, 27
        %v1253 = vpop.permute.xlu0 %1252
        %1254 = vrot.lane.b32.xlu0 %v479, 27
        %v1255 = vpop.permute.xlu0 %1254
        %1256 = vrot.lane.b32.xlu0 %v484, 27
        %v1257 = vpop.permute.xlu0 %1256
        %1258 = vrot.lane.b32.xlu0 %v489, 27
        %v1259 = vpop.permute.xlu0 %1258
        %1260 = vrot.lane.b32.xlu0 %v494, 27
        %v1261 = vpop.permute.xlu0 %1260
        %1262 = vrot.lane.b32.xlu0 %v499, 27
        %v1263 = vpop.permute.xlu0 %1262
        %1264 = vrot.lane.b32.xlu0 %v504, 27
        %v1265 = vpop.permute.xlu0 %1264
        %1274 = vrot.lane.b32.xlu0 %v469, 35
        %v1275 = vpop.permute.xlu0 %1274
        %1276 = vrot.lane.b32.xlu0 %v474, 35
        %v1277 = vpop.permute.xlu0 %1276
        %1278 = vrot.lane.b32.xlu0 %v479, 35
        %v1279 = vpop.permute.xlu0 %1278
        %1280 = vrot.lane.b32.xlu0 %v484, 35
        %v1281 = vpop.permute.xlu0 %1280
        %1282 = vrot.lane.b32.xlu0 %v489, 35
        %v1283 = vpop.permute.xlu0 %1282
        %1284 = vrot.lane.b32.xlu0 %v494, 35
        %v1285 = vpop.permute.xlu0 %1284
        %1286 = vrot.lane.b32.xlu0 %v499, 35
        %v1287 = vpop.permute.xlu0 %1286
        %1288 = vrot.lane.b32.xlu0 %v504, 35
        %v1289 = vpop.permute.xlu0 %1288
        %1298 = vrot.lane.b32.xlu0 %v469, 43
        %v1299 = vpop.permute.xlu0 %1298
        %1300 = vrot.lane.b32.xlu0 %v474, 43
        %v1301 = vpop.permute.xlu0 %1300
        %1302 = vrot.lane.b32.xlu0 %v479, 43
        %v1303 = vpop.permute.xlu0 %1302
        %1304 = vrot.lane.b32.xlu0 %v484, 43
        %v1305 = vpop.permute.xlu0 %1304
        %1306 = vrot.lane.b32.xlu0 %v489, 43
        %v1307 = vpop.permute.xlu0 %1306
        %1308 = vrot.lane.b32.xlu0 %v494, 43
        %v1309 = vpop.permute.xlu0 %1308
        %1310 = vrot.lane.b32.xlu0 %v499, 43
        %v1311 = vpop.permute.xlu0 %1310
        %1312 = vrot.lane.b32.xlu0 %v504, 43
        %v1313 = vpop.permute.xlu0 %1312
        %1322 = vrot.lane.b32.xlu0 %v469, 51
        %v1323 = vpop.permute.xlu0 %1322
        %1324 = vrot.lane.b32.xlu0 %v474, 51
        %v1325 = vpop.permute.xlu0 %1324
        %1326 = vrot.lane.b32.xlu0 %v479, 51
        %v1327 = vpop.permute.xlu0 %1326
        %1328 = vrot.lane.b32.xlu0 %v484, 51
        %v1329 = vpop.permute.xlu0 %1328
        %1330 = vrot.lane.b32.xlu0 %v489, 51
        %v1331 = vpop.permute.xlu0 %1330
        %1332 = vrot.lane.b32.xlu0 %v494, 51
        %v1333 = vpop.permute.xlu0 %1332
        %1334 = vrot.lane.b32.xlu0 %v499, 51
        %v1335 = vpop.permute.xlu0 %1334
        %1336 = vrot.lane.b32.xlu0 %v504, 51
        %v1337 = vpop.permute.xlu0 %1336
        %v1346 = vsel %vm812, %v1155, %v1179
        %v1347 = vsel %vm812, %v1157, %v1181
        %v1348 = vsel %vm812, %v1159, %v1183
        %v1349 = vsel %vm812, %v1161, %v1185
        %v1350 = vsel %vm812, %v1163, %v1187
        %v1351 = vsel %vm812, %v1165, %v1189
        %v1352 = vsel %vm812, %v1167, %v1191
        %v1353 = vsel %vm812, %v1169, %v1193
        %v1354 = vsel %vm821, %v1346, %v1203
        %v1355 = vsel %vm821, %v1347, %v1205
        %v1356 = vsel %vm821, %v1348, %v1207
        %v1357 = vsel %vm821, %v1349, %v1209
        %v1358 = vsel %vm821, %v1350, %v1211
        %v1359 = vsel %vm821, %v1351, %v1213
        %v1360 = vsel %vm821, %v1352, %v1215
        %v1361 = vsel %vm821, %v1353, %v1217
        %v1362 = vsel %vm830, %v1354, %v1227
        %v1363 = vsel %vm830, %v1355, %v1229
        %v1364 = vsel %vm830, %v1356, %v1231
        %v1365 = vsel %vm830, %v1357, %v1233
        %v1366 = vsel %vm830, %v1358, %v1235
        %v1367 = vsel %vm830, %v1359, %v1237
        %v1368 = vsel %vm830, %v1360, %v1239
        %v1369 = vsel %vm830, %v1361, %v1241
        %v1370 = vsel %vm236, %v1362, %v1251
        %v1371 = vsel %vm236, %v1363, %v1253
        %v1372 = vsel %vm236, %v1364, %v1255
        %v1373 = vsel %vm236, %v1365, %v1257
        %v1374 = vsel %vm236, %v1366, %v1259
        %v1375 = vsel %vm236, %v1367, %v1261
        %v1376 = vsel %vm236, %v1368, %v1263
        %v1377 = vsel %vm236, %v1369, %v1265
        %v1378 = vsel %vm847, %v1370, %v1275
        %v1379 = vsel %vm847, %v1371, %v1277
        %v1380 = vsel %vm847, %v1372, %v1279
        %v1381 = vsel %vm847, %v1373, %v1281
        %v1382 = vsel %vm847, %v1374, %v1283
        %v1383 = vsel %vm847, %v1375, %v1285
        %v1384 = vsel %vm847, %v1376, %v1287
        %v1385 = vsel %vm847, %v1377, %v1289
        %v1386 = vsel %vm856, %v1378, %v1299
        %v1387 = vsel %vm856, %v1379, %v1301
        %v1388 = vsel %vm856, %v1380, %v1303
        %v1389 = vsel %vm856, %v1381, %v1305
        %v1390 = vsel %vm856, %v1382, %v1307
        %v1391 = vsel %vm856, %v1383, %v1309
        %v1392 = vsel %vm856, %v1384, %v1311
        %v1393 = vsel %vm856, %v1385, %v1313
        %v1394 = vsel %vm865, %v1386, %v1323
        %v1395 = vsel %vm865, %v1387, %v1325
        %v1396 = vsel %vm865, %v1388, %v1327
        %v1397 = vsel %vm865, %v1389, %v1329
        %v1398 = vsel %vm865, %v1390, %v1331
        %v1399 = vsel %vm865, %v1391, %v1333
        %v1400 = vsel %vm865, %v1392, %v1335
        %v1401 = vsel %vm865, %v1393, %v1337
        %vm1402 = vcmp.eq.s32.totalorder %v604, 2
        %vm1403 = vcmp.eq.s32.totalorder %v605, 2
        %vm1404 = vcmp.eq.s32.totalorder %v606, 2
        %vm1405 = vcmp.eq.s32.totalorder %v607, 2
        %vm1406 = vcmp.eq.s32.totalorder %v608, 2
        %vm1407 = vcmp.eq.s32.totalorder %v609, 2
        %vm1408 = vcmp.eq.s32.totalorder %v610, 2
        %vm1409 = vcmp.eq.s32.totalorder %v611, 2
        %v1410 = vsel %vm1402, %v1394, %v1146
        %v1411 = vsel %vm1403, %v1395, %v1147
        %v1412 = vsel %vm1404, %v1396, %v1148
        %v1413 = vsel %vm1405, %v1397, %v1149
        %v1414 = vsel %vm1406, %v1398, %v1150
        %v1415 = vsel %vm1407, %v1399, %v1151
        %v1416 = vsel %vm1408, %v1400, %v1152
        %v1417 = vsel %vm1409, %v1401, %v1153
        %1418 = vrot.lane.b32.xlu0 %v469, 124
        %v1419 = vpop.permute.xlu0 %1418
        %1420 = vrot.lane.b32.xlu0 %v474, 124
        %v1421 = vpop.permute.xlu0 %1420
        %1422 = vrot.lane.b32.xlu0 %v479, 124
        %v1423 = vpop.permute.xlu0 %1422
        %1424 = vrot.lane.b32.xlu0 %v484, 124
        %v1425 = vpop.permute.xlu0 %1424
        %1426 = vrot.lane.b32.xlu0 %v489, 124
        %v1427 = vpop.permute.xlu0 %1426
        %1428 = vrot.lane.b32.xlu0 %v494, 124
        %v1429 = vpop.permute.xlu0 %1428
        %1430 = vrot.lane.b32.xlu0 %v499, 124
        %v1431 = vpop.permute.xlu0 %1430
        %1432 = vrot.lane.b32.xlu0 %v504, 124
        %v1433 = vpop.permute.xlu0 %1432
        %1442 = vrot.lane.b32.xlu0 %v469, 4
        %v1443 = vpop.permute.xlu0 %1442
        %1444 = vrot.lane.b32.xlu0 %v474, 4
        %v1445 = vpop.permute.xlu0 %1444
        %1446 = vrot.lane.b32.xlu0 %v479, 4
        %v1447 = vpop.permute.xlu0 %1446
        %1448 = vrot.lane.b32.xlu0 %v484, 4
        %v1449 = vpop.permute.xlu0 %1448
        %1450 = vrot.lane.b32.xlu0 %v489, 4
        %v1451 = vpop.permute.xlu0 %1450
        %1452 = vrot.lane.b32.xlu0 %v494, 4
        %v1453 = vpop.permute.xlu0 %1452
        %1454 = vrot.lane.b32.xlu0 %v499, 4
        %v1455 = vpop.permute.xlu0 %1454
        %1456 = vrot.lane.b32.xlu0 %v504, 4
        %v1457 = vpop.permute.xlu0 %1456
        %1466 = vrot.lane.b32.xlu0 %v469, 12
        %v1467 = vpop.permute.xlu0 %1466
        %1468 = vrot.lane.b32.xlu0 %v474, 12
        %v1469 = vpop.permute.xlu0 %1468
        %1470 = vrot.lane.b32.xlu0 %v479, 12
        %v1471 = vpop.permute.xlu0 %1470
        %1472 = vrot.lane.b32.xlu0 %v484, 12
        %v1473 = vpop.permute.xlu0 %1472
        %1474 = vrot.lane.b32.xlu0 %v489, 12
        %v1475 = vpop.permute.xlu0 %1474
        %1476 = vrot.lane.b32.xlu0 %v494, 12
        %v1477 = vpop.permute.xlu0 %1476
        %1478 = vrot.lane.b32.xlu0 %v499, 12
        %v1479 = vpop.permute.xlu0 %1478
        %1480 = vrot.lane.b32.xlu0 %v504, 12
        %v1481 = vpop.permute.xlu0 %1480
        %1490 = vrot.lane.b32.xlu0 %v469, 20
        %v1491 = vpop.permute.xlu0 %1490
        %1492 = vrot.lane.b32.xlu0 %v474, 20
        %v1493 = vpop.permute.xlu0 %1492
        %1494 = vrot.lane.b32.xlu0 %v479, 20
        %v1495 = vpop.permute.xlu0 %1494
        %1496 = vrot.lane.b32.xlu0 %v484, 20
        %v1497 = vpop.permute.xlu0 %1496
        %1498 = vrot.lane.b32.xlu0 %v489, 20
        %v1499 = vpop.permute.xlu0 %1498
        %1500 = vrot.lane.b32.xlu0 %v494, 20
        %v1501 = vpop.permute.xlu0 %1500
        %1502 = vrot.lane.b32.xlu0 %v499, 20
        %v1503 = vpop.permute.xlu0 %1502
        %1504 = vrot.lane.b32.xlu0 %v504, 20
        %v1505 = vpop.permute.xlu0 %1504
        %1514 = vrot.lane.b32.xlu0 %v469, 28
        %v1515 = vpop.permute.xlu0 %1514
        %1516 = vrot.lane.b32.xlu0 %v474, 28
        %v1517 = vpop.permute.xlu0 %1516
        %1518 = vrot.lane.b32.xlu0 %v479, 28
        %v1519 = vpop.permute.xlu0 %1518
        %1520 = vrot.lane.b32.xlu0 %v484, 28
        %v1521 = vpop.permute.xlu0 %1520
        %1522 = vrot.lane.b32.xlu0 %v489, 28
        %v1523 = vpop.permute.xlu0 %1522
        %1524 = vrot.lane.b32.xlu0 %v494, 28
        %v1525 = vpop.permute.xlu0 %1524
        %1526 = vrot.lane.b32.xlu0 %v499, 28
        %v1527 = vpop.permute.xlu0 %1526
        %1528 = vrot.lane.b32.xlu0 %v504, 28
        %v1529 = vpop.permute.xlu0 %1528
        %1538 = vrot.lane.b32.xlu0 %v469, 36
        %v1539 = vpop.permute.xlu0 %1538
        %1540 = vrot.lane.b32.xlu0 %v474, 36
        %v1541 = vpop.permute.xlu0 %1540
        %1542 = vrot.lane.b32.xlu0 %v479, 36
        %v1543 = vpop.permute.xlu0 %1542
        %1544 = vrot.lane.b32.xlu0 %v484, 36
        %v1545 = vpop.permute.xlu0 %1544
        %1546 = vrot.lane.b32.xlu0 %v489, 36
        %v1547 = vpop.permute.xlu0 %1546
        %1548 = vrot.lane.b32.xlu0 %v494, 36
        %v1549 = vpop.permute.xlu0 %1548
        %1550 = vrot.lane.b32.xlu0 %v499, 36
        %v1551 = vpop.permute.xlu0 %1550
        %1552 = vrot.lane.b32.xlu0 %v504, 36
        %v1553 = vpop.permute.xlu0 %1552
        %1562 = vrot.lane.b32.xlu0 %v469, 44
        %v1563 = vpop.permute.xlu0 %1562
        %1564 = vrot.lane.b32.xlu0 %v474, 44
        %v1565 = vpop.permute.xlu0 %1564
        %1566 = vrot.lane.b32.xlu0 %v479, 44
        %v1567 = vpop.permute.xlu0 %1566
        %1568 = vrot.lane.b32.xlu0 %v484, 44
        %v1569 = vpop.permute.xlu0 %1568
        %1570 = vrot.lane.b32.xlu0 %v489, 44
        %v1571 = vpop.permute.xlu0 %1570
        %1572 = vrot.lane.b32.xlu0 %v494, 44
        %v1573 = vpop.permute.xlu0 %1572
        %1574 = vrot.lane.b32.xlu0 %v499, 44
        %v1575 = vpop.permute.xlu0 %1574
        %1576 = vrot.lane.b32.xlu0 %v504, 44
        %v1577 = vpop.permute.xlu0 %1576
        %1586 = vrot.lane.b32.xlu0 %v469, 52
        %v1587 = vpop.permute.xlu0 %1586
        %1588 = vrot.lane.b32.xlu0 %v474, 52
        %v1589 = vpop.permute.xlu0 %1588
        %1590 = vrot.lane.b32.xlu0 %v479, 52
        %v1591 = vpop.permute.xlu0 %1590
        %1592 = vrot.lane.b32.xlu0 %v484, 52
        %v1593 = vpop.permute.xlu0 %1592
        %1594 = vrot.lane.b32.xlu0 %v489, 52
        %v1595 = vpop.permute.xlu0 %1594
        %1596 = vrot.lane.b32.xlu0 %v494, 52
        %v1597 = vpop.permute.xlu0 %1596
        %1598 = vrot.lane.b32.xlu0 %v499, 52
        %v1599 = vpop.permute.xlu0 %1598
        %1600 = vrot.lane.b32.xlu0 %v504, 52
        %v1601 = vpop.permute.xlu0 %1600
        %v1610 = vsel %vm812, %v1419, %v1443
        %v1611 = vsel %vm812, %v1421, %v1445
        %v1612 = vsel %vm812, %v1423, %v1447
        %v1613 = vsel %vm812, %v1425, %v1449
        %v1614 = vsel %vm812, %v1427, %v1451
        %v1615 = vsel %vm812, %v1429, %v1453
        %v1616 = vsel %vm812, %v1431, %v1455
        %v1617 = vsel %vm812, %v1433, %v1457
        %v1618 = vsel %vm821, %v1610, %v1467
        %v1619 = vsel %vm821, %v1611, %v1469
        %v1620 = vsel %vm821, %v1612, %v1471
        %v1621 = vsel %vm821, %v1613, %v1473
        %v1622 = vsel %vm821, %v1614, %v1475
        %v1623 = vsel %vm821, %v1615, %v1477
        %v1624 = vsel %vm821, %v1616, %v1479
        %v1625 = vsel %vm821, %v1617, %v1481
        %v1626 = vsel %vm830, %v1618, %v1491
        %v1627 = vsel %vm830, %v1619, %v1493
        %v1628 = vsel %vm830, %v1620, %v1495
        %v1629 = vsel %vm830, %v1621, %v1497
        %v1630 = vsel %vm830, %v1622, %v1499
        %v1631 = vsel %vm830, %v1623, %v1501
        %v1632 = vsel %vm830, %v1624, %v1503
        %v1633 = vsel %vm830, %v1625, %v1505
        %v1634 = vsel %vm236, %v1626, %v1515
        %v1635 = vsel %vm236, %v1627, %v1517
        %v1636 = vsel %vm236, %v1628, %v1519
        %v1637 = vsel %vm236, %v1629, %v1521
        %v1638 = vsel %vm236, %v1630, %v1523
        %v1639 = vsel %vm236, %v1631, %v1525
        %v1640 = vsel %vm236, %v1632, %v1527
        %v1641 = vsel %vm236, %v1633, %v1529
        %v1642 = vsel %vm847, %v1634, %v1539
        %v1643 = vsel %vm847, %v1635, %v1541
        %v1644 = vsel %vm847, %v1636, %v1543
        %v1645 = vsel %vm847, %v1637, %v1545
        %v1646 = vsel %vm847, %v1638, %v1547
        %v1647 = vsel %vm847, %v1639, %v1549
        %v1648 = vsel %vm847, %v1640, %v1551
        %v1649 = vsel %vm847, %v1641, %v1553
        %v1650 = vsel %vm856, %v1642, %v1563
        %v1651 = vsel %vm856, %v1643, %v1565
        %v1652 = vsel %vm856, %v1644, %v1567
        %v1653 = vsel %vm856, %v1645, %v1569
        %v1654 = vsel %vm856, %v1646, %v1571
        %v1655 = vsel %vm856, %v1647, %v1573
        %v1656 = vsel %vm856, %v1648, %v1575
        %v1657 = vsel %vm856, %v1649, %v1577
        %v1658 = vsel %vm865, %v1650, %v1587
        %v1659 = vsel %vm865, %v1651, %v1589
        %v1660 = vsel %vm865, %v1652, %v1591
        %v1661 = vsel %vm865, %v1653, %v1593
        %v1662 = vsel %vm865, %v1654, %v1595
        %v1663 = vsel %vm865, %v1655, %v1597
        %v1664 = vsel %vm865, %v1656, %v1599
        %v1665 = vsel %vm865, %v1657, %v1601
        %vm1666 = vcmp.eq.s32.totalorder %v604, 3
        %vm1667 = vcmp.eq.s32.totalorder %v605, 3
        %vm1668 = vcmp.eq.s32.totalorder %v606, 3
        %vm1669 = vcmp.eq.s32.totalorder %v607, 3
        %vm1670 = vcmp.eq.s32.totalorder %v608, 3
        %vm1671 = vcmp.eq.s32.totalorder %v609, 3
        %vm1672 = vcmp.eq.s32.totalorder %v610, 3
        %vm1673 = vcmp.eq.s32.totalorder %v611, 3
        %v1674 = vsel %vm1666, %v1658, %v1410
        %v1675 = vsel %vm1667, %v1659, %v1411
        %v1676 = vsel %vm1668, %v1660, %v1412
        %v1677 = vsel %vm1669, %v1661, %v1413
        %v1678 = vsel %vm1670, %v1662, %v1414
        %v1679 = vsel %vm1671, %v1663, %v1415
        %v1680 = vsel %vm1672, %v1664, %v1416
        %v1681 = vsel %vm1673, %v1665, %v1417
        %1682 = vrot.lane.b32.xlu0 %v469, 125
        %v1683 = vpop.permute.xlu0 %1682
        %1684 = vrot.lane.b32.xlu0 %v474, 125
        %v1685 = vpop.permute.xlu0 %1684
        %1686 = vrot.lane.b32.xlu0 %v479, 125
        %v1687 = vpop.permute.xlu0 %1686
        %1688 = vrot.lane.b32.xlu0 %v484, 125
        %v1689 = vpop.permute.xlu0 %1688
        %1690 = vrot.lane.b32.xlu0 %v489, 125
        %v1691 = vpop.permute.xlu0 %1690
        %1692 = vrot.lane.b32.xlu0 %v494, 125
        %v1693 = vpop.permute.xlu0 %1692
        %1694 = vrot.lane.b32.xlu0 %v499, 125
        %v1695 = vpop.permute.xlu0 %1694
        %1696 = vrot.lane.b32.xlu0 %v504, 125
        %v1697 = vpop.permute.xlu0 %1696
        %1706 = vrot.lane.b32.xlu0 %v469, 5
        %v1707 = vpop.permute.xlu0 %1706
        %1708 = vrot.lane.b32.xlu0 %v474, 5
        %v1709 = vpop.permute.xlu0 %1708
        %1710 = vrot.lane.b32.xlu0 %v479, 5
        %v1711 = vpop.permute.xlu0 %1710
        %1712 = vrot.lane.b32.xlu0 %v484, 5
        %v1713 = vpop.permute.xlu0 %1712
        %1714 = vrot.lane.b32.xlu0 %v489, 5
        %v1715 = vpop.permute.xlu0 %1714
        %1716 = vrot.lane.b32.xlu0 %v494, 5
        %v1717 = vpop.permute.xlu0 %1716
        %1718 = vrot.lane.b32.xlu0 %v499, 5
        %v1719 = vpop.permute.xlu0 %1718
        %1720 = vrot.lane.b32.xlu0 %v504, 5
        %v1721 = vpop.permute.xlu0 %1720
        %1730 = vrot.lane.b32.xlu0 %v469, 13
        %v1731 = vpop.permute.xlu0 %1730
        %1732 = vrot.lane.b32.xlu0 %v474, 13
        %v1733 = vpop.permute.xlu0 %1732
        %1734 = vrot.lane.b32.xlu0 %v479, 13
        %v1735 = vpop.permute.xlu0 %1734
        %1736 = vrot.lane.b32.xlu0 %v484, 13
        %v1737 = vpop.permute.xlu0 %1736
        %1738 = vrot.lane.b32.xlu0 %v489, 13
        %v1739 = vpop.permute.xlu0 %1738
        %1740 = vrot.lane.b32.xlu0 %v494, 13
        %v1741 = vpop.permute.xlu0 %1740
        %1742 = vrot.lane.b32.xlu0 %v499, 13
        %v1743 = vpop.permute.xlu0 %1742
        %1744 = vrot.lane.b32.xlu0 %v504, 13
        %v1745 = vpop.permute.xlu0 %1744
        %1754 = vrot.lane.b32.xlu0 %v469, 21
        %v1755 = vpop.permute.xlu0 %1754
        %1756 = vrot.lane.b32.xlu0 %v474, 21
        %v1757 = vpop.permute.xlu0 %1756
        %1758 = vrot.lane.b32.xlu0 %v479, 21
        %v1759 = vpop.permute.xlu0 %1758
        %1760 = vrot.lane.b32.xlu0 %v484, 21
        %v1761 = vpop.permute.xlu0 %1760
        %1762 = vrot.lane.b32.xlu0 %v489, 21
        %v1763 = vpop.permute.xlu0 %1762
        %1764 = vrot.lane.b32.xlu0 %v494, 21
        %v1765 = vpop.permute.xlu0 %1764
        %1766 = vrot.lane.b32.xlu0 %v499, 21
        %v1767 = vpop.permute.xlu0 %1766
        %1768 = vrot.lane.b32.xlu0 %v504, 21
        %v1769 = vpop.permute.xlu0 %1768
        %1778 = vrot.lane.b32.xlu0 %v469, 29
        %v1779 = vpop.permute.xlu0 %1778
        %1780 = vrot.lane.b32.xlu0 %v474, 29
        %v1781 = vpop.permute.xlu0 %1780
        %1782 = vrot.lane.b32.xlu0 %v479, 29
        %v1783 = vpop.permute.xlu0 %1782
        %1784 = vrot.lane.b32.xlu0 %v484, 29
        %v1785 = vpop.permute.xlu0 %1784
        %1786 = vrot.lane.b32.xlu0 %v489, 29
        %v1787 = vpop.permute.xlu0 %1786
        %1788 = vrot.lane.b32.xlu0 %v494, 29
        %v1789 = vpop.permute.xlu0 %1788
        %1790 = vrot.lane.b32.xlu0 %v499, 29
        %v1791 = vpop.permute.xlu0 %1790
        %1792 = vrot.lane.b32.xlu0 %v504, 29
        %v1793 = vpop.permute.xlu0 %1792
        %1802 = vrot.lane.b32.xlu0 %v469, 37
        %v1803 = vpop.permute.xlu0 %1802
        %1804 = vrot.lane.b32.xlu0 %v474, 37
        %v1805 = vpop.permute.xlu0 %1804
        %1806 = vrot.lane.b32.xlu0 %v479, 37
        %v1807 = vpop.permute.xlu0 %1806
        %1808 = vrot.lane.b32.xlu0 %v484, 37
        %v1809 = vpop.permute.xlu0 %1808
        %1810 = vrot.lane.b32.xlu0 %v489, 37
        %v1811 = vpop.permute.xlu0 %1810
        %1812 = vrot.lane.b32.xlu0 %v494, 37
        %v1813 = vpop.permute.xlu0 %1812
        %1814 = vrot.lane.b32.xlu0 %v499, 37
        %v1815 = vpop.permute.xlu0 %1814
        %1816 = vrot.lane.b32.xlu0 %v504, 37
        %v1817 = vpop.permute.xlu0 %1816
        %1826 = vrot.lane.b32.xlu0 %v469, 45
        %v1827 = vpop.permute.xlu0 %1826
        %1828 = vrot.lane.b32.xlu0 %v474, 45
        %v1829 = vpop.permute.xlu0 %1828
        %1830 = vrot.lane.b32.xlu0 %v479, 45
        %v1831 = vpop.permute.xlu0 %1830
        %1832 = vrot.lane.b32.xlu0 %v484, 45
        %v1833 = vpop.permute.xlu0 %1832
        %1834 = vrot.lane.b32.xlu0 %v489, 45
        %v1835 = vpop.permute.xlu0 %1834
        %1836 = vrot.lane.b32.xlu0 %v494, 45
        %v1837 = vpop.permute.xlu0 %1836
        %1838 = vrot.lane.b32.xlu0 %v499, 45
        %v1839 = vpop.permute.xlu0 %1838
        %1840 = vrot.lane.b32.xlu0 %v504, 45
        %v1841 = vpop.permute.xlu0 %1840
        %1850 = vrot.lane.b32.xlu0 %v469, 53
        %v1851 = vpop.permute.xlu0 %1850
        %1852 = vrot.lane.b32.xlu0 %v474, 53
        %v1853 = vpop.permute.xlu0 %1852
        %1854 = vrot.lane.b32.xlu0 %v479, 53
        %v1855 = vpop.permute.xlu0 %1854
        %1856 = vrot.lane.b32.xlu0 %v484, 53
        %v1857 = vpop.permute.xlu0 %1856
        %1858 = vrot.lane.b32.xlu0 %v489, 53
        %v1859 = vpop.permute.xlu0 %1858
        %1860 = vrot.lane.b32.xlu0 %v494, 53
        %v1861 = vpop.permute.xlu0 %1860
        %1862 = vrot.lane.b32.xlu0 %v499, 53
        %v1863 = vpop.permute.xlu0 %1862
        %1864 = vrot.lane.b32.xlu0 %v504, 53
        %v1865 = vpop.permute.xlu0 %1864
        %v1874 = vsel %vm812, %v1683, %v1707
        %v1875 = vsel %vm812, %v1685, %v1709
        %v1876 = vsel %vm812, %v1687, %v1711
        %v1877 = vsel %vm812, %v1689, %v1713
        %v1878 = vsel %vm812, %v1691, %v1715
        %v1879 = vsel %vm812, %v1693, %v1717
        %v1880 = vsel %vm812, %v1695, %v1719
        %v1881 = vsel %vm812, %v1697, %v1721
        %v1882 = vsel %vm821, %v1874, %v1731
        %v1883 = vsel %vm821, %v1875, %v1733
        %v1884 = vsel %vm821, %v1876, %v1735
        %v1885 = vsel %vm821, %v1877, %v1737
        %v1886 = vsel %vm821, %v1878, %v1739
        %v1887 = vsel %vm821, %v1879, %v1741
        %v1888 = vsel %vm821, %v1880, %v1743
        %v1889 = vsel %vm821, %v1881, %v1745
        %v1890 = vsel %vm830, %v1882, %v1755
        %v1891 = vsel %vm830, %v1883, %v1757
        %v1892 = vsel %vm830, %v1884, %v1759
        %v1893 = vsel %vm830, %v1885, %v1761
        %v1894 = vsel %vm830, %v1886, %v1763
        %v1895 = vsel %vm830, %v1887, %v1765
        %v1896 = vsel %vm830, %v1888, %v1767
        %v1897 = vsel %vm830, %v1889, %v1769
        %v1898 = vsel %vm236, %v1890, %v1779
        %v1899 = vsel %vm236, %v1891, %v1781
        %v1900 = vsel %vm236, %v1892, %v1783
        %v1901 = vsel %vm236, %v1893, %v1785
        %v1902 = vsel %vm236, %v1894, %v1787
        %v1903 = vsel %vm236, %v1895, %v1789
        %v1904 = vsel %vm236, %v1896, %v1791
        %v1905 = vsel %vm236, %v1897, %v1793
        %v1906 = vsel %vm847, %v1898, %v1803
        %v1907 = vsel %vm847, %v1899, %v1805
        %v1908 = vsel %vm847, %v1900, %v1807
        %v1909 = vsel %vm847, %v1901, %v1809
        %v1910 = vsel %vm847, %v1902, %v1811
        %v1911 = vsel %vm847, %v1903, %v1813
        %v1912 = vsel %vm847, %v1904, %v1815
        %v1913 = vsel %vm847, %v1905, %v1817
        %v1914 = vsel %vm856, %v1906, %v1827
        %v1915 = vsel %vm856, %v1907, %v1829
        %v1916 = vsel %vm856, %v1908, %v1831
        %v1917 = vsel %vm856, %v1909, %v1833
        %v1918 = vsel %vm856, %v1910, %v1835
        %v1919 = vsel %vm856, %v1911, %v1837
        %v1920 = vsel %vm856, %v1912, %v1839
        %v1921 = vsel %vm856, %v1913, %v1841
        %v1922 = vsel %vm865, %v1914, %v1851
        %v1923 = vsel %vm865, %v1915, %v1853
        %v1924 = vsel %vm865, %v1916, %v1855
        %v1925 = vsel %vm865, %v1917, %v1857
        %v1926 = vsel %vm865, %v1918, %v1859
        %v1927 = vsel %vm865, %v1919, %v1861
        %v1928 = vsel %vm865, %v1920, %v1863
        %v1929 = vsel %vm865, %v1921, %v1865
        %vm1930 = vcmp.eq.s32.totalorder %v604, 4
        %vm1931 = vcmp.eq.s32.totalorder %v605, 4
        %vm1932 = vcmp.eq.s32.totalorder %v606, 4
        %vm1933 = vcmp.eq.s32.totalorder %v607, 4
        %vm1934 = vcmp.eq.s32.totalorder %v608, 4
        %vm1935 = vcmp.eq.s32.totalorder %v609, 4
        %vm1936 = vcmp.eq.s32.totalorder %v610, 4
        %vm1937 = vcmp.eq.s32.totalorder %v611, 4
        %v1938 = vsel %vm1930, %v1922, %v1674
        %v1939 = vsel %vm1931, %v1923, %v1675
        %v1940 = vsel %vm1932, %v1924, %v1676
        %v1941 = vsel %vm1933, %v1925, %v1677
        %v1942 = vsel %vm1934, %v1926, %v1678
        %v1943 = vsel %vm1935, %v1927, %v1679
        %v1944 = vsel %vm1936, %v1928, %v1680
        %v1945 = vsel %vm1937, %v1929, %v1681
        %1946 = vrot.lane.b32.xlu0 %v469, 126
        %v1947 = vpop.permute.xlu0 %1946
        %1948 = vrot.lane.b32.xlu0 %v474, 126
        %v1949 = vpop.permute.xlu0 %1948
        %1950 = vrot.lane.b32.xlu0 %v479, 126
        %v1951 = vpop.permute.xlu0 %1950
        %1952 = vrot.lane.b32.xlu0 %v484, 126
        %v1953 = vpop.permute.xlu0 %1952
        %1954 = vrot.lane.b32.xlu0 %v489, 126
        %v1955 = vpop.permute.xlu0 %1954
        %1956 = vrot.lane.b32.xlu0 %v494, 126
        %v1957 = vpop.permute.xlu0 %1956
        %1958 = vrot.lane.b32.xlu0 %v499, 126
        %v1959 = vpop.permute.xlu0 %1958
        %1960 = vrot.lane.b32.xlu0 %v504, 126
        %v1961 = vpop.permute.xlu0 %1960
        %1970 = vrot.lane.b32.xlu0 %v469, 6
        %v1971 = vpop.permute.xlu0 %1970
        %1972 = vrot.lane.b32.xlu0 %v474, 6
        %v1973 = vpop.permute.xlu0 %1972
        %1974 = vrot.lane.b32.xlu0 %v479, 6
        %v1975 = vpop.permute.xlu0 %1974
        %1976 = vrot.lane.b32.xlu0 %v484, 6
        %v1977 = vpop.permute.xlu0 %1976
        %1978 = vrot.lane.b32.xlu0 %v489, 6
        %v1979 = vpop.permute.xlu0 %1978
        %1980 = vrot.lane.b32.xlu0 %v494, 6
        %v1981 = vpop.permute.xlu0 %1980
        %1982 = vrot.lane.b32.xlu0 %v499, 6
        %v1983 = vpop.permute.xlu0 %1982
        %1984 = vrot.lane.b32.xlu0 %v504, 6
        %v1985 = vpop.permute.xlu0 %1984
        %1994 = vrot.lane.b32.xlu0 %v469, 14
        %v1995 = vpop.permute.xlu0 %1994
        %1996 = vrot.lane.b32.xlu0 %v474, 14
        %v1997 = vpop.permute.xlu0 %1996
        %1998 = vrot.lane.b32.xlu0 %v479, 14
        %v1999 = vpop.permute.xlu0 %1998
        %2000 = vrot.lane.b32.xlu0 %v484, 14
        %v2001 = vpop.permute.xlu0 %2000
        %2002 = vrot.lane.b32.xlu0 %v489, 14
        %v2003 = vpop.permute.xlu0 %2002
        %2004 = vrot.lane.b32.xlu0 %v494, 14
        %v2005 = vpop.permute.xlu0 %2004
        %2006 = vrot.lane.b32.xlu0 %v499, 14
        %v2007 = vpop.permute.xlu0 %2006
        %2008 = vrot.lane.b32.xlu0 %v504, 14
        %v2009 = vpop.permute.xlu0 %2008
        %2018 = vrot.lane.b32.xlu0 %v469, 22
        %v2019 = vpop.permute.xlu0 %2018
        %2020 = vrot.lane.b32.xlu0 %v474, 22
        %v2021 = vpop.permute.xlu0 %2020
        %2022 = vrot.lane.b32.xlu0 %v479, 22
        %v2023 = vpop.permute.xlu0 %2022
        %2024 = vrot.lane.b32.xlu0 %v484, 22
        %v2025 = vpop.permute.xlu0 %2024
        %2026 = vrot.lane.b32.xlu0 %v489, 22
        %v2027 = vpop.permute.xlu0 %2026
        %2028 = vrot.lane.b32.xlu0 %v494, 22
        %v2029 = vpop.permute.xlu0 %2028
        %2030 = vrot.lane.b32.xlu0 %v499, 22
        %v2031 = vpop.permute.xlu0 %2030
        %2032 = vrot.lane.b32.xlu0 %v504, 22
        %v2033 = vpop.permute.xlu0 %2032
        %2042 = vrot.lane.b32.xlu0 %v469, 30
        %v2043 = vpop.permute.xlu0 %2042
        %2044 = vrot.lane.b32.xlu0 %v474, 30
        %v2045 = vpop.permute.xlu0 %2044
        %2046 = vrot.lane.b32.xlu0 %v479, 30
        %v2047 = vpop.permute.xlu0 %2046
        %2048 = vrot.lane.b32.xlu0 %v484, 30
        %v2049 = vpop.permute.xlu0 %2048
        %2050 = vrot.lane.b32.xlu0 %v489, 30
        %v2051 = vpop.permute.xlu0 %2050
        %2052 = vrot.lane.b32.xlu0 %v494, 30
        %v2053 = vpop.permute.xlu0 %2052
        %2054 = vrot.lane.b32.xlu0 %v499, 30
        %v2055 = vpop.permute.xlu0 %2054
        %2056 = vrot.lane.b32.xlu0 %v504, 30
        %v2057 = vpop.permute.xlu0 %2056
        %2066 = vrot.lane.b32.xlu0 %v469, 38
        %v2067 = vpop.permute.xlu0 %2066
        %2068 = vrot.lane.b32.xlu0 %v474, 38
        %v2069 = vpop.permute.xlu0 %2068
        %2070 = vrot.lane.b32.xlu0 %v479, 38
        %v2071 = vpop.permute.xlu0 %2070
        %2072 = vrot.lane.b32.xlu0 %v484, 38
        %v2073 = vpop.permute.xlu0 %2072
        %2074 = vrot.lane.b32.xlu0 %v489, 38
        %v2075 = vpop.permute.xlu0 %2074
        %2076 = vrot.lane.b32.xlu0 %v494, 38
        %v2077 = vpop.permute.xlu0 %2076
        %2078 = vrot.lane.b32.xlu0 %v499, 38
        %v2079 = vpop.permute.xlu0 %2078
        %2080 = vrot.lane.b32.xlu0 %v504, 38
        %v2081 = vpop.permute.xlu0 %2080
        %2090 = vrot.lane.b32.xlu0 %v469, 46
        %v2091 = vpop.permute.xlu0 %2090
        %2092 = vrot.lane.b32.xlu0 %v474, 46
        %v2093 = vpop.permute.xlu0 %2092
        %2094 = vrot.lane.b32.xlu0 %v479, 46
        %v2095 = vpop.permute.xlu0 %2094
        %2096 = vrot.lane.b32.xlu0 %v484, 46
        %v2097 = vpop.permute.xlu0 %2096
        %2098 = vrot.lane.b32.xlu0 %v489, 46
        %v2099 = vpop.permute.xlu0 %2098
        %2100 = vrot.lane.b32.xlu0 %v494, 46
        %v2101 = vpop.permute.xlu0 %2100
        %2102 = vrot.lane.b32.xlu0 %v499, 46
        %v2103 = vpop.permute.xlu0 %2102
        %2104 = vrot.lane.b32.xlu0 %v504, 46
        %v2105 = vpop.permute.xlu0 %2104
        %2114 = vrot.lane.b32.xlu0 %v469, 54
        %v2115 = vpop.permute.xlu0 %2114
        %2116 = vrot.lane.b32.xlu0 %v474, 54
        %v2117 = vpop.permute.xlu0 %2116
        %2118 = vrot.lane.b32.xlu0 %v479, 54
        %v2119 = vpop.permute.xlu0 %2118
        %2120 = vrot.lane.b32.xlu0 %v484, 54
        %v2121 = vpop.permute.xlu0 %2120
        %2122 = vrot.lane.b32.xlu0 %v489, 54
        %v2123 = vpop.permute.xlu0 %2122
        %2124 = vrot.lane.b32.xlu0 %v494, 54
        %v2125 = vpop.permute.xlu0 %2124
        %2126 = vrot.lane.b32.xlu0 %v499, 54
        %v2127 = vpop.permute.xlu0 %2126
        %2128 = vrot.lane.b32.xlu0 %v504, 54
        %v2129 = vpop.permute.xlu0 %2128
        %v2138 = vsel %vm812, %v1947, %v1971
        %v2139 = vsel %vm812, %v1949, %v1973
        %v2140 = vsel %vm812, %v1951, %v1975
        %v2141 = vsel %vm812, %v1953, %v1977
        %v2142 = vsel %vm812, %v1955, %v1979
        %v2143 = vsel %vm812, %v1957, %v1981
        %v2144 = vsel %vm812, %v1959, %v1983
        %v2145 = vsel %vm812, %v1961, %v1985
        %v2146 = vsel %vm821, %v2138, %v1995
        %v2147 = vsel %vm821, %v2139, %v1997
        %v2148 = vsel %vm821, %v2140, %v1999
        %v2149 = vsel %vm821, %v2141, %v2001
        %v2150 = vsel %vm821, %v2142, %v2003
        %v2151 = vsel %vm821, %v2143, %v2005
        %v2152 = vsel %vm821, %v2144, %v2007
        %v2153 = vsel %vm821, %v2145, %v2009
        %v2154 = vsel %vm830, %v2146, %v2019
        %v2155 = vsel %vm830, %v2147, %v2021
        %v2156 = vsel %vm830, %v2148, %v2023
        %v2157 = vsel %vm830, %v2149, %v2025
        %v2158 = vsel %vm830, %v2150, %v2027
        %v2159 = vsel %vm830, %v2151, %v2029
        %v2160 = vsel %vm830, %v2152, %v2031
        %v2161 = vsel %vm830, %v2153, %v2033
        %v2162 = vsel %vm236, %v2154, %v2043
        %v2163 = vsel %vm236, %v2155, %v2045
        %v2164 = vsel %vm236, %v2156, %v2047
        %v2165 = vsel %vm236, %v2157, %v2049
        %v2166 = vsel %vm236, %v2158, %v2051
        %v2167 = vsel %vm236, %v2159, %v2053
        %v2168 = vsel %vm236, %v2160, %v2055
        %v2169 = vsel %vm236, %v2161, %v2057
        %v2170 = vsel %vm847, %v2162, %v2067
        %v2171 = vsel %vm847, %v2163, %v2069
        %v2172 = vsel %vm847, %v2164, %v2071
        %v2173 = vsel %vm847, %v2165, %v2073
        %v2174 = vsel %vm847, %v2166, %v2075
        %v2175 = vsel %vm847, %v2167, %v2077
        %v2176 = vsel %vm847, %v2168, %v2079
        %v2177 = vsel %vm847, %v2169, %v2081
        %v2178 = vsel %vm856, %v2170, %v2091
        %v2179 = vsel %vm856, %v2171, %v2093
        %v2180 = vsel %vm856, %v2172, %v2095
        %v2181 = vsel %vm856, %v2173, %v2097
        %v2182 = vsel %vm856, %v2174, %v2099
        %v2183 = vsel %vm856, %v2175, %v2101
        %v2184 = vsel %vm856, %v2176, %v2103
        %v2185 = vsel %vm856, %v2177, %v2105
        %v2186 = vsel %vm865, %v2178, %v2115
        %v2187 = vsel %vm865, %v2179, %v2117
        %v2188 = vsel %vm865, %v2180, %v2119
        %v2189 = vsel %vm865, %v2181, %v2121
        %v2190 = vsel %vm865, %v2182, %v2123
        %v2191 = vsel %vm865, %v2183, %v2125
        %v2192 = vsel %vm865, %v2184, %v2127
        %v2193 = vsel %vm865, %v2185, %v2129
        %vm2194 = vcmp.eq.s32.totalorder %v604, 5
        %vm2195 = vcmp.eq.s32.totalorder %v605, 5
        %vm2196 = vcmp.eq.s32.totalorder %v606, 5
        %vm2197 = vcmp.eq.s32.totalorder %v607, 5
        %vm2198 = vcmp.eq.s32.totalorder %v608, 5
        %vm2199 = vcmp.eq.s32.totalorder %v609, 5
        %vm2200 = vcmp.eq.s32.totalorder %v610, 5
        %vm2201 = vcmp.eq.s32.totalorder %v611, 5
        %v2202 = vsel %vm2194, %v2186, %v1938
        %v2203 = vsel %vm2195, %v2187, %v1939
        %v2204 = vsel %vm2196, %v2188, %v1940
        %v2205 = vsel %vm2197, %v2189, %v1941
        %v2206 = vsel %vm2198, %v2190, %v1942
        %v2207 = vsel %vm2199, %v2191, %v1943
        %v2208 = vsel %vm2200, %v2192, %v1944
        %v2209 = vsel %vm2201, %v2193, %v1945
        %2210 = vrot.lane.b32.xlu0 %v469, 127
        %v2211 = vpop.permute.xlu0 %2210
        %2212 = vrot.lane.b32.xlu0 %v474, 127
        %v2213 = vpop.permute.xlu0 %2212
        %2214 = vrot.lane.b32.xlu0 %v479, 127
        %v2215 = vpop.permute.xlu0 %2214
        %2216 = vrot.lane.b32.xlu0 %v484, 127
        %v2217 = vpop.permute.xlu0 %2216
        %2218 = vrot.lane.b32.xlu0 %v489, 127
        %v2219 = vpop.permute.xlu0 %2218
        %2220 = vrot.lane.b32.xlu0 %v494, 127
        %v2221 = vpop.permute.xlu0 %2220
        %2222 = vrot.lane.b32.xlu0 %v499, 127
        %v2223 = vpop.permute.xlu0 %2222
        %2224 = vrot.lane.b32.xlu0 %v504, 127
        %v2225 = vpop.permute.xlu0 %2224
        %2234 = vrot.lane.b32.xlu0 %v469, 7
        %v2235 = vpop.permute.xlu0 %2234
        %2236 = vrot.lane.b32.xlu0 %v474, 7
        %v2237 = vpop.permute.xlu0 %2236
        %2238 = vrot.lane.b32.xlu0 %v479, 7
        %v2239 = vpop.permute.xlu0 %2238
        %2240 = vrot.lane.b32.xlu0 %v484, 7
        %v2241 = vpop.permute.xlu0 %2240
        %2242 = vrot.lane.b32.xlu0 %v489, 7
        %v2243 = vpop.permute.xlu0 %2242
        %2244 = vrot.lane.b32.xlu0 %v494, 7
        %v2245 = vpop.permute.xlu0 %2244
        %2246 = vrot.lane.b32.xlu0 %v499, 7
        %v2247 = vpop.permute.xlu0 %2246
        %2248 = vrot.lane.b32.xlu0 %v504, 7
        %v2249 = vpop.permute.xlu0 %2248
        %2258 = vrot.lane.b32.xlu0 %v469, 15
        %v2259 = vpop.permute.xlu0 %2258
        %2260 = vrot.lane.b32.xlu0 %v474, 15
        %v2261 = vpop.permute.xlu0 %2260
        %2262 = vrot.lane.b32.xlu0 %v479, 15
        %v2263 = vpop.permute.xlu0 %2262
        %2264 = vrot.lane.b32.xlu0 %v484, 15
        %v2265 = vpop.permute.xlu0 %2264
        %2266 = vrot.lane.b32.xlu0 %v489, 15
        %v2267 = vpop.permute.xlu0 %2266
        %2268 = vrot.lane.b32.xlu0 %v494, 15
        %v2269 = vpop.permute.xlu0 %2268
        %2270 = vrot.lane.b32.xlu0 %v499, 15
        %v2271 = vpop.permute.xlu0 %2270
        %2272 = vrot.lane.b32.xlu0 %v504, 15
        %v2273 = vpop.permute.xlu0 %2272
        %2282 = vrot.lane.b32.xlu0 %v469, 23
        %v2283 = vpop.permute.xlu0 %2282
        %2284 = vrot.lane.b32.xlu0 %v474, 23
        %v2285 = vpop.permute.xlu0 %2284
        %2286 = vrot.lane.b32.xlu0 %v479, 23
        %v2287 = vpop.permute.xlu0 %2286
        %2288 = vrot.lane.b32.xlu0 %v484, 23
        %v2289 = vpop.permute.xlu0 %2288
        %2290 = vrot.lane.b32.xlu0 %v489, 23
        %v2291 = vpop.permute.xlu0 %2290
        %2292 = vrot.lane.b32.xlu0 %v494, 23
        %v2293 = vpop.permute.xlu0 %2292
        %2294 = vrot.lane.b32.xlu0 %v499, 23
        %v2295 = vpop.permute.xlu0 %2294
        %2296 = vrot.lane.b32.xlu0 %v504, 23
        %v2297 = vpop.permute.xlu0 %2296
        %2306 = vrot.lane.b32.xlu0 %v469, 31
        %v2307 = vpop.permute.xlu0 %2306
        %2308 = vrot.lane.b32.xlu0 %v474, 31
        %v2309 = vpop.permute.xlu0 %2308
        %2310 = vrot.lane.b32.xlu0 %v479, 31
        %v2311 = vpop.permute.xlu0 %2310
        %2312 = vrot.lane.b32.xlu0 %v484, 31
        %v2313 = vpop.permute.xlu0 %2312
        %2314 = vrot.lane.b32.xlu0 %v489, 31
        %v2315 = vpop.permute.xlu0 %2314
        %2316 = vrot.lane.b32.xlu0 %v494, 31
        %v2317 = vpop.permute.xlu0 %2316
        %2318 = vrot.lane.b32.xlu0 %v499, 31
        %v2319 = vpop.permute.xlu0 %2318
        %2320 = vrot.lane.b32.xlu0 %v504, 31
        %v2321 = vpop.permute.xlu0 %2320
        %2330 = vrot.lane.b32.xlu0 %v469, 39
        %v2331 = vpop.permute.xlu0 %2330
        %2332 = vrot.lane.b32.xlu0 %v474, 39
        %v2333 = vpop.permute.xlu0 %2332
        %2334 = vrot.lane.b32.xlu0 %v479, 39
        %v2335 = vpop.permute.xlu0 %2334
        %2336 = vrot.lane.b32.xlu0 %v484, 39
        %v2337 = vpop.permute.xlu0 %2336
        %2338 = vrot.lane.b32.xlu0 %v489, 39
        %v2339 = vpop.permute.xlu0 %2338
        %2340 = vrot.lane.b32.xlu0 %v494, 39
        %v2341 = vpop.permute.xlu0 %2340
        %2342 = vrot.lane.b32.xlu0 %v499, 39
        %v2343 = vpop.permute.xlu0 %2342
        %2344 = vrot.lane.b32.xlu0 %v504, 39
        %v2345 = vpop.permute.xlu0 %2344
        %2354 = vrot.lane.b32.xlu0 %v469, 47
        %v2355 = vpop.permute.xlu0 %2354
        %2356 = vrot.lane.b32.xlu0 %v474, 47
        %v2357 = vpop.permute.xlu0 %2356
        %2358 = vrot.lane.b32.xlu0 %v479, 47
        %v2359 = vpop.permute.xlu0 %2358
        %2360 = vrot.lane.b32.xlu0 %v484, 47
        %v2361 = vpop.permute.xlu0 %2360
        %2362 = vrot.lane.b32.xlu0 %v489, 47
        %v2363 = vpop.permute.xlu0 %2362
        %2364 = vrot.lane.b32.xlu0 %v494, 47
        %v2365 = vpop.permute.xlu0 %2364
        %2366 = vrot.lane.b32.xlu0 %v499, 47
        %v2367 = vpop.permute.xlu0 %2366
        %2368 = vrot.lane.b32.xlu0 %v504, 47
        %v2369 = vpop.permute.xlu0 %2368
        %2378 = vrot.lane.b32.xlu0 %v469, 55
        %v2379 = vpop.permute.xlu0 %2378
        %2380 = vrot.lane.b32.xlu0 %v474, 55
        %v2381 = vpop.permute.xlu0 %2380
        %2382 = vrot.lane.b32.xlu0 %v479, 55
        %v2383 = vpop.permute.xlu0 %2382
        %2384 = vrot.lane.b32.xlu0 %v484, 55
        %v2385 = vpop.permute.xlu0 %2384
        %2386 = vrot.lane.b32.xlu0 %v489, 55
        %v2387 = vpop.permute.xlu0 %2386
        %2388 = vrot.lane.b32.xlu0 %v494, 55
        %v2389 = vpop.permute.xlu0 %2388
        %2390 = vrot.lane.b32.xlu0 %v499, 55
        %v2391 = vpop.permute.xlu0 %2390
        %2392 = vrot.lane.b32.xlu0 %v504, 55
        %v2393 = vpop.permute.xlu0 %2392
        %v2402 = vsel %vm812, %v2211, %v2235
        %v2403 = vsel %vm812, %v2213, %v2237
        %v2404 = vsel %vm812, %v2215, %v2239
        %v2405 = vsel %vm812, %v2217, %v2241
        %v2406 = vsel %vm812, %v2219, %v2243
        %v2407 = vsel %vm812, %v2221, %v2245
        %v2408 = vsel %vm812, %v2223, %v2247
        %v2409 = vsel %vm812, %v2225, %v2249
        %v2410 = vsel %vm821, %v2402, %v2259
        %v2411 = vsel %vm821, %v2403, %v2261
        %v2412 = vsel %vm821, %v2404, %v2263
        %v2413 = vsel %vm821, %v2405, %v2265
        %v2414 = vsel %vm821, %v2406, %v2267
        %v2415 = vsel %vm821, %v2407, %v2269
        %v2416 = vsel %vm821, %v2408, %v2271
        %v2417 = vsel %vm821, %v2409, %v2273
        %v2418 = vsel %vm830, %v2410, %v2283
        %v2419 = vsel %vm830, %v2411, %v2285
        %v2420 = vsel %vm830, %v2412, %v2287
        %v2421 = vsel %vm830, %v2413, %v2289
        %v2422 = vsel %vm830, %v2414, %v2291
        %v2423 = vsel %vm830, %v2415, %v2293
        %v2424 = vsel %vm830, %v2416, %v2295
        %v2425 = vsel %vm830, %v2417, %v2297
        %v2426 = vsel %vm236, %v2418, %v2307
        %v2427 = vsel %vm236, %v2419, %v2309
        %v2428 = vsel %vm236, %v2420, %v2311
        %v2429 = vsel %vm236, %v2421, %v2313
        %v2430 = vsel %vm236, %v2422, %v2315
        %v2431 = vsel %vm236, %v2423, %v2317
        %v2432 = vsel %vm236, %v2424, %v2319
        %v2433 = vsel %vm236, %v2425, %v2321
        %v2434 = vsel %vm847, %v2426, %v2331
        %v2435 = vsel %vm847, %v2427, %v2333
        %v2436 = vsel %vm847, %v2428, %v2335
        %v2437 = vsel %vm847, %v2429, %v2337
        %v2438 = vsel %vm847, %v2430, %v2339
        %v2439 = vsel %vm847, %v2431, %v2341
        %v2440 = vsel %vm847, %v2432, %v2343
        %v2441 = vsel %vm847, %v2433, %v2345
        %v2442 = vsel %vm856, %v2434, %v2355
        %v2443 = vsel %vm856, %v2435, %v2357
        %v2444 = vsel %vm856, %v2436, %v2359
        %v2445 = vsel %vm856, %v2437, %v2361
        %v2446 = vsel %vm856, %v2438, %v2363
        %v2447 = vsel %vm856, %v2439, %v2365
        %v2448 = vsel %vm856, %v2440, %v2367
        %v2449 = vsel %vm856, %v2441, %v2369
        %v2450 = vsel %vm865, %v2442, %v2379
        %v2451 = vsel %vm865, %v2443, %v2381
        %v2452 = vsel %vm865, %v2444, %v2383
        %v2453 = vsel %vm865, %v2445, %v2385
        %v2454 = vsel %vm865, %v2446, %v2387
        %v2455 = vsel %vm865, %v2447, %v2389
        %v2456 = vsel %vm865, %v2448, %v2391
        %v2457 = vsel %vm865, %v2449, %v2393
        %vm2458 = vcmp.eq.s32.totalorder %v604, 6
        %vm2459 = vcmp.eq.s32.totalorder %v605, 6
        %vm2460 = vcmp.eq.s32.totalorder %v606, 6
        %vm2461 = vcmp.eq.s32.totalorder %v607, 6
        %vm2462 = vcmp.eq.s32.totalorder %v608, 6
        %vm2463 = vcmp.eq.s32.totalorder %v609, 6
        %vm2464 = vcmp.eq.s32.totalorder %v610, 6
        %vm2465 = vcmp.eq.s32.totalorder %v611, 6
        %v2466 = vsel %vm2458, %v2450, %v2202
        %v2467 = vsel %vm2459, %v2451, %v2203
        %v2468 = vsel %vm2460, %v2452, %v2204
        %v2469 = vsel %vm2461, %v2453, %v2205
        %v2470 = vsel %vm2462, %v2454, %v2206
        %v2471 = vsel %vm2463, %v2455, %v2207
        %v2472 = vsel %vm2464, %v2456, %v2208
        %v2473 = vsel %vm2465, %v2457, %v2209
        %2474 = vrot.lane.b32.xlu0 %v469, 8
        %v2475 = vpop.permute.xlu0 %2474
        %2476 = vrot.lane.b32.xlu0 %v474, 8
        %v2477 = vpop.permute.xlu0 %2476
        %2478 = vrot.lane.b32.xlu0 %v479, 8
        %v2479 = vpop.permute.xlu0 %2478
        %2480 = vrot.lane.b32.xlu0 %v484, 8
        %v2481 = vpop.permute.xlu0 %2480
        %2482 = vrot.lane.b32.xlu0 %v489, 8
        %v2483 = vpop.permute.xlu0 %2482
        %2484 = vrot.lane.b32.xlu0 %v494, 8
        %v2485 = vpop.permute.xlu0 %2484
        %2486 = vrot.lane.b32.xlu0 %v499, 8
        %v2487 = vpop.permute.xlu0 %2486
        %2488 = vrot.lane.b32.xlu0 %v504, 8
        %v2489 = vpop.permute.xlu0 %2488
        %2498 = vrot.lane.b32.xlu0 %v469, 16
        %v2499 = vpop.permute.xlu0 %2498
        %2500 = vrot.lane.b32.xlu0 %v474, 16
        %v2501 = vpop.permute.xlu0 %2500
        %2502 = vrot.lane.b32.xlu0 %v479, 16
        %v2503 = vpop.permute.xlu0 %2502
        %2504 = vrot.lane.b32.xlu0 %v484, 16
        %v2505 = vpop.permute.xlu0 %2504
        %2506 = vrot.lane.b32.xlu0 %v489, 16
        %v2507 = vpop.permute.xlu0 %2506
        %2508 = vrot.lane.b32.xlu0 %v494, 16
        %v2509 = vpop.permute.xlu0 %2508
        %2510 = vrot.lane.b32.xlu0 %v499, 16
        %v2511 = vpop.permute.xlu0 %2510
        %2512 = vrot.lane.b32.xlu0 %v504, 16
        %v2513 = vpop.permute.xlu0 %2512
        %2522 = vrot.lane.b32.xlu0 %v469, 24
        %v2523 = vpop.permute.xlu0 %2522
        %2524 = vrot.lane.b32.xlu0 %v474, 24
        %v2525 = vpop.permute.xlu0 %2524
        %2526 = vrot.lane.b32.xlu0 %v479, 24
        %v2527 = vpop.permute.xlu0 %2526
        %2528 = vrot.lane.b32.xlu0 %v484, 24
        %v2529 = vpop.permute.xlu0 %2528
        %2530 = vrot.lane.b32.xlu0 %v489, 24
        %v2531 = vpop.permute.xlu0 %2530
        %2532 = vrot.lane.b32.xlu0 %v494, 24
        %v2533 = vpop.permute.xlu0 %2532
        %2534 = vrot.lane.b32.xlu0 %v499, 24
        %v2535 = vpop.permute.xlu0 %2534
        %2536 = vrot.lane.b32.xlu0 %v504, 24
        %v2537 = vpop.permute.xlu0 %2536
        %2546 = vrot.lane.b32.xlu0 %v469, 32
        %v2547 = vpop.permute.xlu0 %2546
        %2548 = vrot.lane.b32.xlu0 %v474, 32
        %v2549 = vpop.permute.xlu0 %2548
        %2550 = vrot.lane.b32.xlu0 %v479, 32
        %v2551 = vpop.permute.xlu0 %2550
        %2552 = vrot.lane.b32.xlu0 %v484, 32
        %v2553 = vpop.permute.xlu0 %2552
        %2554 = vrot.lane.b32.xlu0 %v489, 32
        %v2555 = vpop.permute.xlu0 %2554
        %2556 = vrot.lane.b32.xlu0 %v494, 32
        %v2557 = vpop.permute.xlu0 %2556
        %2558 = vrot.lane.b32.xlu0 %v499, 32
        %v2559 = vpop.permute.xlu0 %2558
        %2560 = vrot.lane.b32.xlu0 %v504, 32
        %v2561 = vpop.permute.xlu0 %2560
        %2570 = vrot.lane.b32.xlu0 %v469, 40
        %v2571 = vpop.permute.xlu0 %2570
        %2572 = vrot.lane.b32.xlu0 %v474, 40
        %v2573 = vpop.permute.xlu0 %2572
        %2574 = vrot.lane.b32.xlu0 %v479, 40
        %v2575 = vpop.permute.xlu0 %2574
        %2576 = vrot.lane.b32.xlu0 %v484, 40
        %v2577 = vpop.permute.xlu0 %2576
        %2578 = vrot.lane.b32.xlu0 %v489, 40
        %v2579 = vpop.permute.xlu0 %2578
        %2580 = vrot.lane.b32.xlu0 %v494, 40
        %v2581 = vpop.permute.xlu0 %2580
        %2582 = vrot.lane.b32.xlu0 %v499, 40
        %v2583 = vpop.permute.xlu0 %2582
        %2584 = vrot.lane.b32.xlu0 %v504, 40
        %v2585 = vpop.permute.xlu0 %2584
        %2594 = vrot.lane.b32.xlu0 %v469, 48
        %v2595 = vpop.permute.xlu0 %2594
        %2596 = vrot.lane.b32.xlu0 %v474, 48
        %v2597 = vpop.permute.xlu0 %2596
        %2598 = vrot.lane.b32.xlu0 %v479, 48
        %v2599 = vpop.permute.xlu0 %2598
        %2600 = vrot.lane.b32.xlu0 %v484, 48
        %v2601 = vpop.permute.xlu0 %2600
        %2602 = vrot.lane.b32.xlu0 %v489, 48
        %v2603 = vpop.permute.xlu0 %2602
        %2604 = vrot.lane.b32.xlu0 %v494, 48
        %v2605 = vpop.permute.xlu0 %2604
        %2606 = vrot.lane.b32.xlu0 %v499, 48
        %v2607 = vpop.permute.xlu0 %2606
        %2608 = vrot.lane.b32.xlu0 %v504, 48
        %v2609 = vpop.permute.xlu0 %2608
        %2618 = vrot.lane.b32.xlu0 %v469, 56
        %v2619 = vpop.permute.xlu0 %2618
        %2620 = vrot.lane.b32.xlu0 %v474, 56
        %v2621 = vpop.permute.xlu0 %2620
        %2622 = vrot.lane.b32.xlu0 %v479, 56
        %v2623 = vpop.permute.xlu0 %2622
        %2624 = vrot.lane.b32.xlu0 %v484, 56
        %v2625 = vpop.permute.xlu0 %2624
        %2626 = vrot.lane.b32.xlu0 %v489, 56
        %v2627 = vpop.permute.xlu0 %2626
        %2628 = vrot.lane.b32.xlu0 %v494, 56
        %v2629 = vpop.permute.xlu0 %2628
        %2630 = vrot.lane.b32.xlu0 %v499, 56
        %v2631 = vpop.permute.xlu0 %2630
        %2632 = vrot.lane.b32.xlu0 %v504, 56
        %v2633 = vpop.permute.xlu0 %2632
        %v2642 = vsel %vm812, %v469, %v2475
        %v2643 = vsel %vm812, %v474, %v2477
        %v2644 = vsel %vm812, %v479, %v2479
        %v2645 = vsel %vm812, %v484, %v2481
        %v2646 = vsel %vm812, %v489, %v2483
        %v2647 = vsel %vm812, %v494, %v2485
        %v2648 = vsel %vm812, %v499, %v2487
        %v2649 = vsel %vm812, %v504, %v2489
        %v2650 = vsel %vm821, %v2642, %v2499
        %v2651 = vsel %vm821, %v2643, %v2501
        %v2652 = vsel %vm821, %v2644, %v2503
        %v2653 = vsel %vm821, %v2645, %v2505
        %v2654 = vsel %vm821, %v2646, %v2507
        %v2655 = vsel %vm821, %v2647, %v2509
        %v2656 = vsel %vm821, %v2648, %v2511
        %v2657 = vsel %vm821, %v2649, %v2513
        %v2658 = vsel %vm830, %v2650, %v2523
        %v2659 = vsel %vm830, %v2651, %v2525
        %v2660 = vsel %vm830, %v2652, %v2527
        %v2661 = vsel %vm830, %v2653, %v2529
        %v2662 = vsel %vm830, %v2654, %v2531
        %v2663 = vsel %vm830, %v2655, %v2533
        %v2664 = vsel %vm830, %v2656, %v2535
        %v2665 = vsel %vm830, %v2657, %v2537
        %v2666 = vsel %vm236, %v2658, %v2547
        %v2667 = vsel %vm236, %v2659, %v2549
        %v2668 = vsel %vm236, %v2660, %v2551
        %v2669 = vsel %vm236, %v2661, %v2553
        %v2670 = vsel %vm236, %v2662, %v2555
        %v2671 = vsel %vm236, %v2663, %v2557
        %v2672 = vsel %vm236, %v2664, %v2559
        %v2673 = vsel %vm236, %v2665, %v2561
        %v2674 = vsel %vm847, %v2666, %v2571
        %v2675 = vsel %vm847, %v2667, %v2573
        %v2676 = vsel %vm847, %v2668, %v2575
        %v2677 = vsel %vm847, %v2669, %v2577
        %v2678 = vsel %vm847, %v2670, %v2579
        %v2679 = vsel %vm847, %v2671, %v2581
        %v2680 = vsel %vm847, %v2672, %v2583
        %v2681 = vsel %vm847, %v2673, %v2585
        %v2682 = vsel %vm856, %v2674, %v2595
        %v2683 = vsel %vm856, %v2675, %v2597
        %v2684 = vsel %vm856, %v2676, %v2599
        %v2685 = vsel %vm856, %v2677, %v2601
        %v2686 = vsel %vm856, %v2678, %v2603
        %v2687 = vsel %vm856, %v2679, %v2605
        %v2688 = vsel %vm856, %v2680, %v2607
        %v2689 = vsel %vm856, %v2681, %v2609
        %v2690 = vsel %vm865, %v2682, %v2619
        %v2691 = vsel %vm865, %v2683, %v2621
        %v2692 = vsel %vm865, %v2684, %v2623
        %v2693 = vsel %vm865, %v2685, %v2625
        %v2694 = vsel %vm865, %v2686, %v2627
        %v2695 = vsel %vm865, %v2687, %v2629
        %v2696 = vsel %vm865, %v2688, %v2631
        %v2697 = vsel %vm865, %v2689, %v2633
        %vm2698 = vcmp.eq.s32.totalorder %v604, 7
        %vm2699 = vcmp.eq.s32.totalorder %v605, 7
        %vm2700 = vcmp.eq.s32.totalorder %v606, 7
        %vm2701 = vcmp.eq.s32.totalorder %v607, 7
        %vm2702 = vcmp.eq.s32.totalorder %v608, 7
        %vm2703 = vcmp.eq.s32.totalorder %v609, 7
        %vm2704 = vcmp.eq.s32.totalorder %v610, 7
        %vm2705 = vcmp.eq.s32.totalorder %v611, 7
        %v2706 = vsel %vm2698, %v2690, %v2466
        %v2707 = vsel %vm2699, %v2691, %v2467
        %v2708 = vsel %vm2700, %v2692, %v2468
        %v2709 = vsel %vm2701, %v2693, %v2469
        %v2710 = vsel %vm2702, %v2694, %v2470
        %v2711 = vsel %vm2703, %v2695, %v2471
        %v2712 = vsel %vm2704, %v2696, %v2472
        %v2713 = vsel %vm2705, %v2697, %v2473
        %vm2714 = vcmask 523264
        %2715 = vst.msk [vmem:[%s205] sm:$0xff] %vm2714, %v2706
        %2716 = vst.msk [vmem:[%s205 + $0x8] sm:$0xff] %vm2714, %v2707
        %2717 = vst.msk [vmem:[%s205 + $0x10] sm:$0xff] %vm2714, %v2708
        %2718 = vst.msk [vmem:[%s205 + $0x18] sm:$0xff] %vm2714, %v2709
        %2719 = vst.msk [vmem:[%s205 + $0x20] sm:$0xff] %vm2714, %v2710
        %2720 = vst.msk [vmem:[%s205 + $0x28] sm:$0xff] %vm2714, %v2711
        %2721 = vst.msk [vmem:[%s205 + $0x30] sm:$0xff] %vm2714, %v2712
        %2722 = vst.msk [vmem:[%s205 + $0x38] sm:$0xff] %vm2714, %v2713
        %s2723 = sand.u32 %s120, 1
        %s2724 = scalar_lea.sflag [#allocation3], %s2723
        %s2725 = sand.u32 %s120, 1
        %s2726 = smul.addr %s2725, 64
        %s2727 = scalar_lea.vmem [#allocation2], %s2726
        // Predicated region
        $region37: #{tpu_custom_call.1} parent=35 // pred_check
          %p2728 = pneg %p130
        $region38: #{tpu_custom_call.1} parent=35 // pred_check_branch
          %2730 = sbr.rel (%p2728) target = $region40
        $region39: #{tpu_custom_call.1} parent=35 // pred_region
          %s2732 = ssub.s32 1024, 1024
          %2733 = vsyncadd %s2724, %s2732
          %s2734 = smul.addr %s18, 8
          %s2735 = smul.addr %s2734, 128
          %s2736 = scalar_lea.hbm %s4, %s2735
          %s2737 = sshll.u32 %s2727, 4
          %s2738 = int_to_ptr.vmem [resolvable:$true] %s2737
          %2743 = dma.vmem_to_hbm [thread:$0]  %s2738, 1024, %s2736, %s2724, 128, 128, 8
        $region40: #{tpu_custom_call.1} parent=35 // pred_fallthru
          _
      $region36: #{tpu_custom_call.1} parent=5 // pred_fallthru
        _
      %p2744 = scmp.le.s32.totalorder 2, %s13
      // Predicated region
      $region41: #{tpu_custom_call.1} parent=5 // pred_check
        %p2745 = pneg %p2744
      $region42: #{tpu_custom_call.1} parent=5 // pred_check_branch
        %2747 = sbr.rel (%p2745) target = $region44
      $region43: #{tpu_custom_call.1} parent=5 // pred_region
        %s2748 = ssub.s32 %s13, 2
        // Predicated region
        $region45: #{tpu_custom_call.1} parent=43 // pred_check
          %p2749 = pneg %p136
        $region46: #{tpu_custom_call.1} parent=43 // pred_check_branch
          %2751 = sbr.rel (%p2749) target = $region48
        $region47: #{tpu_custom_call.1} parent=43 // pred_region
          %s2752 = sand.u32 %s121, 1
          %s2753 = scalar_lea.sflag [#allocation3], %s2752
          %s2754 = sand.u32 %s121, 1
          %s2755 = smul.addr %s2754, 64
          %s2756 = scalar_lea.vmem [#allocation2], %s2755
          %2757 = dma.done %s2753, 1024
        $region48: #{tpu_custom_call.1} parent=43 // pred_fallthru
          _
      $region44: #{tpu_custom_call.1} parent=5 // pred_fallthru
        _
    $region6: #{tpu_custom_call.1} parent=1 // loop_footer
      %s17 = sadd.s32 1, %s13
    $region7: #{tpu_custom_call.1} parent=1 // loop_footer_branch
      %12 = sbr.rel target = $region3
    $region8: #{tpu_custom_call.1} parent=1 // loop_exit
      _
    %2758 = vsyncpa [#allocation3], 1
    %s2759 = scalar_lea.sflag [#allocation3], 1
    %2760 = vsyncpa %s2759, 1

</llo_original>
